<compile_context>
chip_gen: v7x
topology: tpu7x:2x2x1
jax: 0.10.0
libtpu: 0.0.40
codegen_flags: <defaults>
</compile_context>

<pallas_src>
import jax
import jax.numpy as jnp
from jax.experimental import pallas as pl
from jax.experimental.pallas import tpu as pltpu

DIM_PARAMS = 56
DIM_EMO = 128
DIM_IN = DIM_PARAMS + DIM_EMO          # 184
DIM_MID = 128
GROUPS = 8
LN_EPS = 1e-5
HALO = 8                               # halo slab rows (only rows 0,1 are used)


def _round_up(x, m):
    return ((x + m - 1) // m) * m


def _make_kernel(tile, n_tiles, seq_len, seq_pad, compute_dtype):
    """Build the kernel closed over static tiling parameters."""

    def ln_w1(p, e, gamma_p, gamma_e, beta_p, beta_e, w1p, w1e, b1):
        """LayerNorm over the virtual 184-ch concat + Conv1d(184->128,k=1) + ReLU."""
        total = (jnp.sum(p, axis=-1, keepdims=True)
                 + jnp.sum(e, axis=-1, keepdims=True))
        mean = total * (1.0 / DIM_IN)
        dp = p - mean
        de = e - mean
        var = (jnp.sum(dp * dp, axis=-1, keepdims=True)
               + jnp.sum(de * de, axis=-1, keepdims=True)) * (1.0 / DIM_IN)
        rstd = jax.lax.rsqrt(var + LN_EPS)
        xn_p = dp * rstd * gamma_p + beta_p
        xn_e = de * rstd * gamma_e + beta_e
        h1 = (jnp.dot(xn_p.astype(compute_dtype), w1p,
                      preferred_element_type=jnp.float32)
              + jnp.dot(xn_e.astype(compute_dtype), w1e,
                        preferred_element_type=jnp.float32)
              + b1)
        return jnp.maximum(h1, 0.0)

    def kernel(params_ref, emo_ref, halo_p_ref, halo_e_ref, slab_ref,
               w1p_ref, w1e_ref, w2_ref, w3_ref, out_ref):
        j = pl.program_id(1)

        # Packed per-channel vectors (all static, lane-0-aligned slices).
        gamma_p = slab_ref[0:1, :DIM_PARAMS]
        gamma_e = slab_ref[1:2, :]
        beta_p = slab_ref[2:3, :DIM_PARAMS]
        beta_e = slab_ref[3:4, :]
        b1 = slab_ref[4:5, :]
        b2 = slab_ref[5:6, :]
        b3 = slab_ref[6:7, :]            # zero-padded to 128 output lanes

        w1p = w1p_ref[...]               # (56, 128)
        w1e = w1e_ref[...]               # (128, 128)

        # ---- LN + Conv1d(184->128, k=1) + ReLU on the main tile ----
        p = params_ref[...].astype(jnp.float32)       # (tile, 56)
        e = emo_ref[...].astype(jnp.float32)          # (tile, 128)
        h1 = ln_w1(p, e, gamma_p, gamma_e, beta_p, beta_e, w1p, w1e, b1)

        row = jax.lax.broadcasted_iota(jnp.int32, (tile, DIM_MID), 0)
        if seq_pad != seq_len:
            # Zero h1 on padded rows so they act like Conv1d's zero padding.
            h1 = jnp.where(row + j * tile < seq_len, h1, 0.0)

        # ---- Halo rows: h1 at global rows j*tile - 1 and (j+1)*tile ----
        hp = halo_p_ref[...].astype(jnp.float32)      # (HALO, 56)
        he = halo_e_ref[...].astype(jnp.float32)      # (HALO, 128)
        h1_halo = ln_w1(hp, he, gamma_p, gamma_e, beta_p, beta_e, w1p, w1e, b1)
        prev_row = jnp.where(j > 0, h1_halo[0:1, :], 0.0)            # (1,128)
        next_row = jnp.where(j < n_tiles - 1, h1_halo[1:2, :], 0.0)  # (1,128)

        # ---- Conv1d(128->128, k=3, pad=1, groups=8) as 3 dense matmuls ----
        h1_prev = pltpu.roll(h1, shift=1, axis=0)            # x[t-1]
        h1_prev = jnp.where(row == 0, prev_row, h1_prev)
        h1_next = pltpu.roll(h1, shift=tile - 1, axis=0)      # x[t+1]
        h1_next = jnp.where(row == tile - 1, next_row, h1_next)

        h2 = (jnp.dot(h1_prev.astype(compute_dtype), w2_ref[0],
                      preferred_element_type=jnp.float32)
              + jnp.dot(h1.astype(compute_dtype), w2_ref[1],
                        preferred_element_type=jnp.float32)
              + jnp.dot(h1_next.astype(compute_dtype), w2_ref[2],
                        preferred_element_type=jnp.float32)
              + b2)
        h2 = jnp.maximum(h2, 0.0)

        # ---- Conv1d(128->56, k=1) (output padded to 128 lanes) + residual ----
        y = jnp.dot(h2.astype(compute_dtype), w3_ref[...],
                    preferred_element_type=jnp.float32) + b3    # (tile, 128)
        p128 = jnp.concatenate(
            [p, jnp.zeros((tile, DIM_MID - DIM_PARAMS), jnp.float32)], axis=-1)
        out_ref[...] = (y + p128).astype(out_ref.dtype)

    return kernel


def param_fixer_pallas(params, emo, weights, *,
                       compute_dtype=jnp.bfloat16, tile_t=2048):
    """params: (B, T, 56) f32, emo: (B, T, 128) f32 -> (B, T, 56) f32."""
    B, T, _ = params.shape
    gamma, beta, w1, b1, w2_full, b2, w3, b3 = weights

    tile = min(_round_up(T, 8), _round_up(tile_t, 8))
    t_pad = _round_up(T, tile)
    n_tiles = t_pad // tile

    if t_pad != T:
        pad = ((0, 0), (0, t_pad - T), (0, 0))
        params_p = jnp.pad(params, pad)
        emo_p = jnp.pad(emo, pad)
    else:
        params_p, emo_p = params, emo

    # +-1-row halo slabs for the k=3 conv, gathered once in the wrapper.
    # Row 0 = global row j*tile-1, row 1 = global row (j+1)*tile; rows 2..7 are
    # dummies so the in-kernel halo matmul has a sublane-aligned (8, C) LHS.
    starts = jnp.arange(n_tiles) * tile
    halo_idx = jnp.stack(
        [jnp.clip(starts - 1, 0, t_pad - 1),
         jnp.clip(starts + tile, 0, t_pad - 1)]
        + [jnp.zeros_like(starts)] * (HALO - 2), axis=-1)          # (nT, HALO)
    halo_p = jnp.take(params_p, halo_idx, axis=1)                  # (B,nT,HALO,56)
    halo_e = jnp.take(emo_p, halo_idx, axis=1)                     # (B,nT,HALO,128)

    def _pad_lane(v, n=DIM_MID):
        return jnp.pad(v, ((0, 0), (0, n - v.shape[-1])))

    # Pack the six per-channel vectors into one (8, 128) f32 slab.
    slab = jnp.concatenate([
        _pad_lane(gamma[:, :DIM_PARAMS]), gamma[:, DIM_PARAMS:],
        _pad_lane(beta[:, :DIM_PARAMS]), beta[:, DIM_PARAMS:],
        b1, b2, _pad_lane(b3),
        jnp.zeros((1, DIM_MID), jnp.float32)], axis=0).astype(jnp.float32)

    # Repack weights into lane-friendly layouts.
    w1p = w1[:DIM_PARAMS].astype(compute_dtype)        # (56, 128)
    w1e = w1[DIM_PARAMS:].astype(compute_dtype)        # (128, 128)
    w2s = w2_full.astype(compute_dtype)                # (3, 128, 128)
    w3p = _pad_lane(w3).astype(compute_dtype)          # (128, 128) lane-dense out

    kernel = _make_kernel(tile, n_tiles, T, t_pad, compute_dtype)

    def _full(a):
        nd = a.ndim
        return pl.BlockSpec(a.shape, lambda b, j, _nd=nd: (0,) * _nd)

    flops = 2 * B * t_pad * (DIM_PARAMS * DIM_MID + DIM_MID * DIM_MID
                             + 3 * DIM_MID * DIM_MID + DIM_MID * DIM_MID)
    weight_bytes = (DIM_PARAMS * DIM_MID + DIM_MID * DIM_MID
                    + 3 * DIM_MID * DIM_MID + DIM_MID * DIM_MID) * 2
    bytes_accessed = (B * t_pad * (DIM_IN + DIM_MID) * 4      # stream in + out
                      + B * n_tiles * HALO * DIM_IN * 4       # halo slabs
                      + weight_bytes)

    out = pl.pallas_call(
        kernel,
        out_shape=jax.ShapeDtypeStruct((B, t_pad, DIM_MID), params.dtype),
        grid_spec=pltpu.PrefetchScalarGridSpec(
            num_scalar_prefetch=0,
            grid=(B, n_tiles),
            in_specs=[
                pl.BlockSpec((None, tile, DIM_PARAMS), lambda b, j: (b, j, 0)),
                pl.BlockSpec((None, tile, DIM_EMO), lambda b, j: (b, j, 0)),
                pl.BlockSpec((None, None, HALO, DIM_PARAMS),
                             lambda b, j: (b, j, 0, 0)),
                pl.BlockSpec((None, None, HALO, DIM_EMO),
                             lambda b, j: (b, j, 0, 0)),
                _full(slab),
                _full(w1p), _full(w1e), _full(w2s), _full(w3p),
            ],
            out_specs=pl.BlockSpec((None, tile, DIM_MID),
                                   lambda b, j: (b, j, 0)),
        ),
        compiler_params=pltpu.CompilerParams(
            dimension_semantics=("parallel", "parallel"),
            vmem_limit_bytes=32 * 1024 * 1024),
        cost_estimate=pl.CostEstimate(
            flops=flops, transcendentals=B * t_pad,
            bytes_accessed=bytes_accessed),
    )(params_p, emo_p, halo_p, halo_e, slab, w1p, w1e, w2s, w3p)

    return out[:, :T, :DIM_PARAMS]


def make_weights(key):
    """Deterministic synthetic parameters matching the nn.Module shapes."""
    ks = jax.random.split(key, 8)
    # LayerNorm(184): gamma, beta  -> stored as (1, 184) for lane layout.
    gamma = (1.0 + 0.01 * jax.random.normal(ks[0], (1, DIM_IN))).astype(jnp.float32)
    beta = (0.01 * jax.random.normal(ks[1], (1, DIM_IN))).astype(jnp.float32)

    # Conv1d(184, 128, 1): weight (128, 184, 1) -> (184, 128) matmul form.
    w1_t = 0.05 * jax.random.normal(ks[2], (DIM_MID, DIM_IN)).astype(jnp.float32)
    w1 = w1_t.T                                               # (184, 128)
    b1 = 0.01 * jax.random.normal(ks[3], (1, DIM_MID)).astype(jnp.float32)

    # Conv1d(128, 128, 3, groups=8): weight (128, 16, 3).
    per_g = DIM_MID // GROUPS                                 # 16
    w2_g = 0.05 * jax.random.normal(ks[4], (DIM_MID, per_g, 3)).astype(jnp.float32)
    # Expand block-diagonal to full (3, 128_in, 128_out) matmul form.
    w2_full = jnp.zeros((3, DIM_MID, DIM_MID), jnp.float32)
    for g in range(GROUPS):
        o0, i0 = g * per_g, g * per_g
        # y[t, o] += x_shift_k[t, i] * w[o, i - i0, k]
        blk = jnp.transpose(w2_g[o0:o0 + per_g], (2, 1, 0))   # (3, 16_in, 16_out)
        w2_full = w2_full.at[:, i0:i0 + per_g, o0:o0 + per_g].set(blk)
    b2 = 0.01 * jax.random.normal(ks[5], (1, DIM_MID)).astype(jnp.float32)

    # Conv1d(128, 56, 1): weight (56, 128, 1) -> (128, 56).
    w3_t = 0.05 * jax.random.normal(ks[6], (DIM_PARAMS, DIM_MID)).astype(jnp.float32)
    w3 = w3_t.T                                               # (128, 56)
    b3 = 0.01 * jax.random.normal(ks[7], (1, DIM_PARAMS)).astype(jnp.float32)

    return (gamma, beta, w1, b1, w2_full, b2, w3, b3)


def param_fixer_ref(params, emo, weights):
    """Pure-JAX f32 reference (same math as the PyTorch module)."""
    gamma, beta, w1, b1, w2, b2, w3, b3 = weights
    x = jnp.concatenate([params, emo], axis=-1)
    mean = jnp.mean(x, axis=-1, keepdims=True)
    var = jnp.mean((x - mean) ** 2, axis=-1, keepdims=True)
    xn = (x - mean) * jax.lax.rsqrt(var + LN_EPS) * gamma + beta
    h1 = jnp.maximum(jnp.einsum("btc,cd->btd", xn, w1) + b1, 0.0)
    zero = jnp.zeros_like(h1[:, :1, :])
    h1_prev = jnp.concatenate([zero, h1[:, :-1, :]], axis=1)
    h1_next = jnp.concatenate([h1[:, 1:, :], zero], axis=1)
    h2 = (jnp.einsum("btc,cd->btd", h1_prev, w2[0])
          + jnp.einsum("btc,cd->btd", h1, w2[1])
          + jnp.einsum("btc,cd->btd", h1_next, w2[2]) + b2)
    h2 = jnp.maximum(h2, 0.0)
    return jnp.einsum("btc,cd->btd", h2, w3) + b3 + params


if __name__ == "__main__":
    key = jax.random.PRNGKey(0)
    k_p, k_e, k_w, k_p2, k_e2 = jax.random.split(key, 5)
    weights = make_weights(k_w)

    # Case 1: small shapes implied by the module (B=2, T=8) — single tile.
    B, T = 2, 8
    params = jax.random.normal(k_p, (B, T, DIM_PARAMS), jnp.float32)
    emo = jax.random.normal(k_e, (B, T, DIM_EMO), jnp.float32)
    ref = param_fixer_ref(params, emo, weights)

    out_f32 = jax.block_until_ready(
        param_fixer_pallas(params, emo, weights, compute_dtype=jnp.float32))
    assert out_f32.shape == (B, T, DIM_PARAMS)
    assert jnp.max(jnp.abs(out_f32 - ref)) < 2e-3, "f32 path mismatch vs reference"

    out_bf16 = jax.block_until_ready(
        param_fixer_pallas(params, emo, weights, compute_dtype=jnp.bfloat16))
    assert jnp.max(jnp.abs(out_bf16 - ref)) < 5e-2, "bf16 path mismatch vs reference"

    # Case 2: multi-tile + padded sequence (exercises halo and masking paths).
    B2, T2 = 2, 20
    params2 = jax.random.normal(k_p2, (B2, T2, DIM_PARAMS), jnp.float32)
    emo2 = jax.random.normal(k_e2, (B2, T2, DIM_EMO), jnp.float32)
    ref2 = param_fixer_ref(params2, emo2, weights)
    out2 = jax.block_until_ready(
        param_fixer_pallas(params2, emo2, weights,
                           compute_dtype=jnp.float32, tile_t=8))
    assert out2.shape == (B2, T2, DIM_PARAMS)
    assert jnp.max(jnp.abs(out2 - ref2)) < 2e-3, "tiled path mismatch vs reference"

    print("KERNEL_OK")
</pallas_src>

<mosaic_0001>
module attributes {stable_mosaic.version = 11 : i64} {
  func.func @kernel(%arg0: i32, %arg1: i32, %arg2: memref<1x8x56xf32, #tpu.memory_space<vmem>>, %arg3: memref<1x8x128xf32, #tpu.memory_space<vmem>>, %arg4: memref<1x1x8x56xf32, #tpu.memory_space<vmem>>, %arg5: memref<1x1x8x128xf32, #tpu.memory_space<vmem>>, %arg6: memref<8x128xf32, #tpu.memory_space<vmem>>, %arg7: memref<56x128xf32, #tpu.memory_space<vmem>>, %arg8: memref<128x128xf32, #tpu.memory_space<vmem>>, %arg9: memref<3x128x128xf32, #tpu.memory_space<vmem>>, %arg10: memref<128x128xf32, #tpu.memory_space<vmem>>, %arg11: memref<1x8x128xf32, #tpu.memory_space<vmem>>) attributes {dimension_semantics = [#tpu.dimension_semantics<parallel>, #tpu.dimension_semantics<parallel>], iteration_bounds = array<i64: 2, 1>, scalar_prefetch = 0 : i64, scratch_operands = 0 : i64, tpu.core_type = #tpu.core_type<tc>, window_params = [{transform_indices = @transform_0, window_bounds = array<i64: 1, 8, 56>}, {transform_indices = @transform_1, window_bounds = array<i64: 1, 8, 128>}, {transform_indices = @transform_2, window_bounds = array<i64: 1, 1, 8, 56>}, {transform_indices = @transform_3, window_bounds = array<i64: 1, 1, 8, 128>}, {pipeline_mode = #tpu.pipeline_mode<synchronous>, transform_indices = @transform_4, window_bounds = array<i64: 8, 128>}, {pipeline_mode = #tpu.pipeline_mode<synchronous>, transform_indices = @transform_5, window_bounds = array<i64: 56, 128>}, {pipeline_mode = #tpu.pipeline_mode<synchronous>, transform_indices = @transform_6, window_bounds = array<i64: 128, 128>}, {pipeline_mode = #tpu.pipeline_mode<synchronous>, transform_indices = @transform_7, window_bounds = array<i64: 3, 128, 128>}, {pipeline_mode = #tpu.pipeline_mode<synchronous>, transform_indices = @transform_8, window_bounds = array<i64: 128, 128>}, {transform_indices = @transform_9, window_bounds = array<i64: 1, 8, 128>}]} {
    %c0 = arith.constant 0 : index
    %c0_0 = arith.constant 0 : index
    %0 = vector.load %arg6[%c0, %c0_0] : memref<8x128xf32, #tpu.memory_space<vmem>>, vector<1x56xf32>
    %c1 = arith.constant 1 : index
    %c0_1 = arith.constant 0 : index
    %1 = vector.load %arg6[%c1, %c0_1] : memref<8x128xf32, #tpu.memory_space<vmem>>, vector<1x128xf32>
    %c2 = arith.constant 2 : index
    %c0_2 = arith.constant 0 : index
    %2 = vector.load %arg6[%c2, %c0_2] : memref<8x128xf32, #tpu.memory_space<vmem>>, vector<1x56xf32>
    %c3 = arith.constant 3 : index
    %c0_3 = arith.constant 0 : index
    %3 = vector.load %arg6[%c3, %c0_3] : memref<8x128xf32, #tpu.memory_space<vmem>>, vector<1x128xf32>
    %c4 = arith.constant 4 : index
    %c0_4 = arith.constant 0 : index
    %4 = vector.load %arg6[%c4, %c0_4] : memref<8x128xf32, #tpu.memory_space<vmem>>, vector<1x128xf32>
    %c5 = arith.constant 5 : index
    %c0_5 = arith.constant 0 : index
    %5 = vector.load %arg6[%c5, %c0_5] : memref<8x128xf32, #tpu.memory_space<vmem>>, vector<1x128xf32>
    %c6 = arith.constant 6 : index
    %c0_6 = arith.constant 0 : index
    %6 = vector.load %arg6[%c6, %c0_6] : memref<8x128xf32, #tpu.memory_space<vmem>>, vector<1x128xf32>
    %c0_7 = arith.constant 0 : index
    %c0_8 = arith.constant 0 : index
    %7 = vector.load %arg7[%c0_7, %c0_8] : memref<56x128xf32, #tpu.memory_space<vmem>>, vector<56x128xf32>
    %c0_9 = arith.constant 0 : index
    %c0_10 = arith.constant 0 : index
    %8 = vector.load %arg8[%c0_9, %c0_10] : memref<128x128xf32, #tpu.memory_space<vmem>>, vector<128x128xf32>
    %c0_11 = arith.constant 0 : index
    %c0_12 = arith.constant 0 : index
    %c0_13 = arith.constant 0 : index
    %9 = vector.load %arg2[%c0_11, %c0_12, %c0_13] : memref<1x8x56xf32, #tpu.memory_space<vmem>>, vector<1x8x56xf32>
    %10 = vector.shape_cast %9 : vector<1x8x56xf32> to vector<8x56xf32>
    %c0_14 = arith.constant 0 : index
    %c0_15 = arith.constant 0 : index
    %c0_16 = arith.constant 0 : index
    %11 = vector.load %arg3[%c0_14, %c0_15, %c0_16] : memref<1x8x128xf32, #tpu.memory_space<vmem>>, vector<1x8x128xf32>
    %12 = vector.shape_cast %11 : vector<1x8x128xf32> to vector<8x128xf32>
    %cst = arith.constant dense<0.000000e+00> : vector<8xf32>
    %13 = vector.multi_reduction <add>, %10, %cst [1] : vector<8x56xf32> to vector<8xf32>
    %14 = vector.shape_cast %13 : vector<8xf32> to vector<8x1xf32>
    %cst_17 = arith.constant dense<0.000000e+00> : vector<8xf32>
    %15 = vector.multi_reduction <add>, %12, %cst_17 [1] : vector<8x128xf32> to vector<8xf32>
    %16 = vector.shape_cast %15 : vector<8xf32> to vector<8x1xf32>
    %17 = arith.addf %14, %16 : vector<8x1xf32>
    %cst_18 = arith.constant 0.00543478271 : f32
    %18 = vector.broadcast %cst_18 : f32 to vector<8x1xf32>
    %19 = arith.mulf %17, %18 : vector<8x1xf32>
    %20 = vector.broadcast %19 : vector<8x1xf32> to vector<8x56xf32>
    %21 = arith.subf %10, %20 : vector<8x56xf32>
    %22 = vector.broadcast %19 : vector<8x1xf32> to vector<8x128xf32>
    %23 = arith.subf %12, %22 : vector<8x128xf32>
    %24 = arith.mulf %21, %21 : vector<8x56xf32>
    %cst_19 = arith.constant dense<0.000000e+00> : vector<8xf32>
    %25 = vector.multi_reduction <add>, %24, %cst_19 [1] : vector<8x56xf32> to vector<8xf32>
    %26 = vector.shape_cast %25 : vector<8xf32> to vector<8x1xf32>
    %27 = arith.mulf %23, %23 : vector<8x128xf32>
    %cst_20 = arith.constant dense<0.000000e+00> : vector<8xf32>
    %28 = vector.multi_reduction <add>, %27, %cst_20 [1] : vector<8x128xf32> to vector<8xf32>
    %29 = vector.shape_cast %28 : vector<8xf32> to vector<8x1xf32>
    %30 = arith.addf %26, %29 : vector<8x1xf32>
    %cst_21 = arith.constant 0.00543478271 : f32
    %31 = vector.broadcast %cst_21 : f32 to vector<8x1xf32>
    %32 = arith.mulf %30, %31 : vector<8x1xf32>
    %cst_22 = arith.constant 9.99999974E-6 : f32
    %33 = vector.broadcast %cst_22 : f32 to vector<8x1xf32>
    %34 = arith.addf %32, %33 : vector<8x1xf32>
    %35 = math.rsqrt %34 : vector<8x1xf32>
    %36 = vector.broadcast %35 : vector<8x1xf32> to vector<8x56xf32>
    %37 = arith.mulf %21, %36 : vector<8x56xf32>
    %38 = vector.broadcast %0 : vector<1x56xf32> to vector<8x56xf32>
    %39 = arith.mulf %37, %38 : vector<8x56xf32>
    %40 = vector.broadcast %2 : vector<1x56xf32> to vector<8x56xf32>
    %41 = arith.addf %39, %40 : vector<8x56xf32>
    %42 = vector.broadcast %35 : vector<8x1xf32> to vector<8x128xf32>
    %43 = arith.mulf %23, %42 : vector<8x128xf32>
    %44 = vector.broadcast %1 : vector<1x128xf32> to vector<8x128xf32>
    %45 = arith.mulf %43, %44 : vector<8x128xf32>
    %46 = vector.broadcast %3 : vector<1x128xf32> to vector<8x128xf32>
    %47 = arith.addf %45, %46 : vector<8x128xf32>
    %cst_23 = arith.constant dense<0.000000e+00> : vector<8x128xf32>
    %48 = tpu.matmul %41, %7, %cst_23 {dimension_numbers = #tpu.dot_dimension_numbers<[1], [0], [0], [1], [0, 0, 1, 1], [], []>} : vector<8x56xf32>, vector<56x128xf32>, vector<8x128xf32> -> vector<8x128xf32>
    %cst_24 = arith.constant dense<0.000000e+00> : vector<8x128xf32>
    %49 = tpu.matmul %47, %8, %cst_24 {dimension_numbers = #tpu.dot_dimension_numbers<[1], [0], [0], [1], [0, 0, 1, 1], [], []>} : vector<8x128xf32>, vector<128x128xf32>, vector<8x128xf32> -> vector<8x128xf32>
    %50 = arith.addf %48, %49 : vector<8x128xf32>
    %51 = vector.broadcast %4 : vector<1x128xf32> to vector<8x128xf32>
    %52 = arith.addf %50, %51 : vector<8x128xf32>
    %cst_25 = arith.constant 0.000000e+00 : f32
    %53 = vector.broadcast %cst_25 : f32 to vector<8x128xf32>
    %54 = arith.maximumf %52, %53 : vector<8x128xf32>
    %55 = tpu.iota {dimensions = array<i32: 0>} : vector<8x128xi32>
    %c0_26 = arith.constant 0 : index
    %c0_27 = arith.constant 0 : index
    %c0_28 = arith.constant 0 : index
    %c0_29 = arith.constant 0 : index
    %56 = vector.load %arg4[%c0_26, %c0_27, %c0_28, %c0_29] : memref<1x1x8x56xf32, #tpu.memory_space<vmem>>, vector<1x1x8x56xf32>
    %57 = vector.shape_cast %56 : vector<1x1x8x56xf32> to vector<8x56xf32>
    %c0_30 = arith.constant 0 : index
    %c0_31 = arith.constant 0 : index
    %c0_32 = arith.constant 0 : index
    %c0_33 = arith.constant 0 : index
    %58 = vector.load %arg5[%c0_30, %c0_31, %c0_32, %c0_33] : memref<1x1x8x128xf32, #tpu.memory_space<vmem>>, vector<1x1x8x128xf32>
    %59 = vector.shape_cast %58 : vector<1x1x8x128xf32> to vector<8x128xf32>
    %cst_34 = arith.constant dense<0.000000e+00> : vector<8xf32>
    %60 = vector.multi_reduction <add>, %57, %cst_34 [1] : vector<8x56xf32> to vector<8xf32>
    %61 = vector.shape_cast %60 : vector<8xf32> to vector<8x1xf32>
    %cst_35 = arith.constant dense<0.000000e+00> : vector<8xf32>
    %62 = vector.multi_reduction <add>, %59, %cst_35 [1] : vector<8x128xf32> to vector<8xf32>
    %63 = vector.shape_cast %62 : vector<8xf32> to vector<8x1xf32>
    %64 = arith.addf %61, %63 : vector<8x1xf32>
    %cst_36 = arith.constant 0.00543478271 : f32
    %65 = vector.broadcast %cst_36 : f32 to vector<8x1xf32>
    %66 = arith.mulf %64, %65 : vector<8x1xf32>
    %67 = vector.broadcast %66 : vector<8x1xf32> to vector<8x56xf32>
    %68 = arith.subf %57, %67 : vector<8x56xf32>
    %69 = vector.broadcast %66 : vector<8x1xf32> to vector<8x128xf32>
    %70 = arith.subf %59, %69 : vector<8x128xf32>
    %71 = arith.mulf %68, %68 : vector<8x56xf32>
    %cst_37 = arith.constant dense<0.000000e+00> : vector<8xf32>
    %72 = vector.multi_reduction <add>, %71, %cst_37 [1] : vector<8x56xf32> to vector<8xf32>
    %73 = vector.shape_cast %72 : vector<8xf32> to vector<8x1xf32>
    %74 = arith.mulf %70, %70 : vector<8x128xf32>
    %cst_38 = arith.constant dense<0.000000e+00> : vector<8xf32>
    %75 = vector.multi_reduction <add>, %74, %cst_38 [1] : vector<8x128xf32> to vector<8xf32>
    %76 = vector.shape_cast %75 : vector<8xf32> to vector<8x1xf32>
    %77 = arith.addf %73, %76 : vector<8x1xf32>
    %cst_39 = arith.constant 0.00543478271 : f32
    %78 = vector.broadcast %cst_39 : f32 to vector<8x1xf32>
    %79 = arith.mulf %77, %78 : vector<8x1xf32>
    %cst_40 = arith.constant 9.99999974E-6 : f32
    %80 = vector.broadcast %cst_40 : f32 to vector<8x1xf32>
    %81 = arith.addf %79, %80 : vector<8x1xf32>
    %82 = math.rsqrt %81 : vector<8x1xf32>
    %83 = vector.broadcast %82 : vector<8x1xf32> to vector<8x56xf32>
    %84 = arith.mulf %68, %83 : vector<8x56xf32>
    %85 = vector.broadcast %0 : vector<1x56xf32> to vector<8x56xf32>
    %86 = arith.mulf %84, %85 : vector<8x56xf32>
    %87 = vector.broadcast %2 : vector<1x56xf32> to vector<8x56xf32>
    %88 = arith.addf %86, %87 : vector<8x56xf32>
    %89 = vector.broadcast %82 : vector<8x1xf32> to vector<8x128xf32>
    %90 = arith.mulf %70, %89 : vector<8x128xf32>
    %91 = vector.broadcast %1 : vector<1x128xf32> to vector<8x128xf32>
    %92 = arith.mulf %90, %91 : vector<8x128xf32>
    %93 = vector.broadcast %3 : vector<1x128xf32> to vector<8x128xf32>
    %94 = arith.addf %92, %93 : vector<8x128xf32>
    %cst_41 = arith.constant dense<0.000000e+00> : vector<8x128xf32>
    %95 = tpu.matmul %88, %7, %cst_41 {dimension_numbers = #tpu.dot_dimension_numbers<[1], [0], [0], [1], [0, 0, 1, 1], [], []>} : vector<8x56xf32>, vector<56x128xf32>, vector<8x128xf32> -> vector<8x128xf32>
    %cst_42 = arith.constant dense<0.000000e+00> : vector<8x128xf32>
    %96 = tpu.matmul %94, %8, %cst_42 {dimension_numbers = #tpu.dot_dimension_numbers<[1], [0], [0], [1], [0, 0, 1, 1], [], []>} : vector<8x128xf32>, vector<128x128xf32>, vector<8x128xf32> -> vector<8x128xf32>
    %97 = arith.addf %95, %96 : vector<8x128xf32>
    %98 = vector.broadcast %4 : vector<1x128xf32> to vector<8x128xf32>
    %99 = arith.addf %97, %98 : vector<8x128xf32>
    %cst_43 = arith.constant 0.000000e+00 : f32
    %100 = vector.broadcast %cst_43 : f32 to vector<8x128xf32>
    %101 = arith.maximumf %99, %100 : vector<8x128xf32>
    %c0_i32 = arith.constant 0 : i32
    %102 = arith.cmpi sgt, %arg1, %c0_i32 : i32
    %103 = vector.extract_strided_slice %101 {offsets = [0, 0], sizes = [1, 128], strides = [1, 1]} : vector<8x128xf32> to vector<1x128xf32>
    %cst_44 = arith.constant 0.000000e+00 : f32
    %104 = vector.broadcast %cst_44 : f32 to vector<1x128xf32>
    %105 = arith.select %102, %103, %104 : vector<1x128xf32>
    %c0_i32_45 = arith.constant 0 : i32
    %106 = arith.cmpi slt, %arg1, %c0_i32_45 : i32
    %107 = vector.extract_strided_slice %101 {offsets = [1, 0], sizes = [1, 128], strides = [1, 1]} : vector<8x128xf32> to vector<1x128xf32>
    %cst_46 = arith.constant 0.000000e+00 : f32
    %108 = vector.broadcast %cst_46 : f32 to vector<1x128xf32>
    %109 = arith.select %106, %107, %108 : vector<1x128xf32>
    %c1_i32 = arith.constant 1 : i32
    %110 = tpu.dynamic_rotate %54 by %c1_i32 dim 0 : vector<8x128xf32>, i32 -> vector<8x128xf32>
    %c0_i32_47 = arith.constant 0 : i32
    %111 = vector.broadcast %c0_i32_47 : i32 to vector<8x128xi32>
    %112 = arith.cmpi eq, %55, %111 : vector<8x128xi32>
    %113 = vector.shape_cast %105 : vector<1x128xf32> to vector<1x128xf32>
    %114 = vector.broadcast %113 : vector<1x128xf32> to vector<8x128xf32>
    %115 = arith.select %112, %114, %110 : vector<8x128xi1>, vector<8x128xf32>
    %c7_i32 = arith.constant 7 : i32
    %116 = tpu.dynamic_rotate %54 by %c7_i32 dim 0 : vector<8x128xf32>, i32 -> vector<8x128xf32>
    %c7_i32_48 = arith.constant 7 : i32
    %117 = vector.broadcast %c7_i32_48 : i32 to vector<8x128xi32>
    %118 = arith.cmpi eq, %55, %117 : vector<8x128xi32>
    %119 = vector.shape_cast %109 : vector<1x128xf32> to vector<1x128xf32>
    %120 = vector.broadcast %119 : vector<1x128xf32> to vector<8x128xf32>
    %121 = arith.select %118, %120, %116 : vector<8x128xi1>, vector<8x128xf32>
    %c0_49 = arith.constant 0 : index
    %c0_50 = arith.constant 0 : index
    %c0_51 = arith.constant 0 : index
    %122 = vector.load %arg9[%c0_49, %c0_50, %c0_51] : memref<3x128x128xf32, #tpu.memory_space<vmem>>, vector<1x128x128xf32>
    %123 = vector.shape_cast %122 : vector<1x128x128xf32> to vector<128x128xf32>
    %cst_52 = arith.constant dense<0.000000e+00> : vector<8x128xf32>
    %124 = tpu.matmul %115, %123, %cst_52 {dimension_numbers = #tpu.dot_dimension_numbers<[1], [0], [0], [1], [0, 0, 1, 1], [], []>} : vector<8x128xf32>, vector<128x128xf32>, vector<8x128xf32> -> vector<8x128xf32>
    %c1_53 = arith.constant 1 : index
    %c0_54 = arith.constant 0 : index
    %c0_55 = arith.constant 0 : index
    %125 = vector.load %arg9[%c1_53, %c0_54, %c0_55] : memref<3x128x128xf32, #tpu.memory_space<vmem>>, vector<1x128x128xf32>
    %126 = vector.shape_cast %125 : vector<1x128x128xf32> to vector<128x128xf32>
    %cst_56 = arith.constant dense<0.000000e+00> : vector<8x128xf32>
    %127 = tpu.matmul %54, %126, %cst_56 {dimension_numbers = #tpu.dot_dimension_numbers<[1], [0], [0], [1], [0, 0, 1, 1], [], []>} : vector<8x128xf32>, vector<128x128xf32>, vector<8x128xf32> -> vector<8x128xf32>
    %128 = arith.addf %124, %127 : vector<8x128xf32>
    %c2_57 = arith.constant 2 : index
    %c0_58 = arith.constant 0 : index
    %c0_59 = arith.constant 0 : index
    %129 = vector.load %arg9[%c2_57, %c0_58, %c0_59] : memref<3x128x128xf32, #tpu.memory_space<vmem>>, vector<1x128x128xf32>
    %130 = vector.shape_cast %129 : vector<1x128x128xf32> to vector<128x128xf32>
    %cst_60 = arith.constant dense<0.000000e+00> : vector<8x128xf32>
    %131 = tpu.matmul %121, %130, %cst_60 {dimension_numbers = #tpu.dot_dimension_numbers<[1], [0], [0], [1], [0, 0, 1, 1], [], []>} : vector<8x128xf32>, vector<128x128xf32>, vector<8x128xf32> -> vector<8x128xf32>
    %132 = arith.addf %128, %131 : vector<8x128xf32>
    %133 = vector.broadcast %5 : vector<1x128xf32> to vector<8x128xf32>
    %134 = arith.addf %132, %133 : vector<8x128xf32>
    %cst_61 = arith.constant 0.000000e+00 : f32
    %135 = vector.broadcast %cst_61 : f32 to vector<8x128xf32>
    %136 = arith.maximumf %134, %135 : vector<8x128xf32>
    %c0_62 = arith.constant 0 : index
    %c0_63 = arith.constant 0 : index
    %137 = vector.load %arg10[%c0_62, %c0_63] : memref<128x128xf32, #tpu.memory_space<vmem>>, vector<128x128xf32>
    %cst_64 = arith.constant dense<0.000000e+00> : vector<8x128xf32>
    %138 = tpu.matmul %136, %137, %cst_64 {dimension_numbers = #tpu.dot_dimension_numbers<[1], [0], [0], [1], [0, 0, 1, 1], [], []>} : vector<8x128xf32>, vector<128x128xf32>, vector<8x128xf32> -> vector<8x128xf32>
    %139 = vector.broadcast %6 : vector<1x128xf32> to vector<8x128xf32>
    %140 = arith.addf %138, %139 : vector<8x128xf32>
    %cst_65 = arith.constant 0.000000e+00 : f32
    %141 = vector.broadcast %cst_65 : f32 to vector<8x72xf32>
    %142 = tpu.concatenate %10, %141 in 1 : vector<8x56xf32>, vector<8x72xf32> -> vector<8x128xf32>
    %143 = arith.addf %140, %142 : vector<8x128xf32>
    %c0_66 = arith.constant 0 : index
    %c0_67 = arith.constant 0 : index
    %c0_68 = arith.constant 0 : index
    %144 = vector.load %arg11[%c0_66, %c0_67, %c0_68] : memref<1x8x128xf32, #tpu.memory_space<vmem>>, vector<1x8x128xf32>
    %145 = vector.shape_cast %144 : vector<1x8x128xf32> to vector<8x128xf32>
    %146 = vector.shape_cast %143 : vector<8x128xf32> to vector<1x8x128xf32>
    tpu.vector_store %arg11[%c0_66, %c0_67, %c0_68], %146 {strides = array<i32>} : memref<1x8x128xf32, #tpu.memory_space<vmem>>, vector<1x8x128xf32>,
    return
  }
  func.func @transform_0(%arg0: i32, %arg1: i32) -> (i32, i32, i32) {
    %c0_i32 = arith.constant 0 : i32
    %c0_i32_0 = arith.constant 0 : i32
    return %arg0, %arg1, %c0_i32 : i32, i32, i32
  }
  func.func @transform_1(%arg0: i32, %arg1: i32) -> (i32, i32, i32) {
    %c0_i32 = arith.constant 0 : i32
    %c0_i32_0 = arith.constant 0 : i32
    return %arg0, %arg1, %c0_i32 : i32, i32, i32
  }
  func.func @transform_2(%arg0: i32, %arg1: i32) -> (i32, i32, i32, i32) {
    %c0_i32 = arith.constant 0 : i32
    %c0_i32_0 = arith.constant 0 : i32
    %c0_i32_1 = arith.constant 0 : i32
    return %arg0, %arg1, %c0_i32, %c0_i32_0 : i32, i32, i32, i32
  }
  func.func @transform_3(%arg0: i32, %arg1: i32) -> (i32, i32, i32, i32) {
    %c0_i32 = arith.constant 0 : i32
    %c0_i32_0 = arith.constant 0 : i32
    %c0_i32_1 = arith.constant 0 : i32
    return %arg0, %arg1, %c0_i32, %c0_i32_0 : i32, i32, i32, i32
  }
  func.func @transform_4(%arg0: i32, %arg1: i32) -> (i32, i32) {
    %c0_i32 = arith.constant 0 : i32
    %c0_i32_0 = arith.constant 0 : i32
    %c0_i32_1 = arith.constant 0 : i32
    return %c0_i32, %c0_i32_0 : i32, i32
  }
  func.func @transform_5(%arg0: i32, %arg1: i32) -> (i32, i32) {
    %c0_i32 = arith.constant 0 : i32
    %c0_i32_0 = arith.constant 0 : i32
    %c0_i32_1 = arith.constant 0 : i32
    return %c0_i32, %c0_i32_0 : i32, i32
  }
  func.func @transform_6(%arg0: i32, %arg1: i32) -> (i32, i32) {
    %c0_i32 = arith.constant 0 : i32
    %c0_i32_0 = arith.constant 0 : i32
    %c0_i32_1 = arith.constant 0 : i32
    return %c0_i32, %c0_i32_0 : i32, i32
  }
  func.func @transform_7(%arg0: i32, %arg1: i32) -> (i32, i32, i32) {
    %c0_i32 = arith.constant 0 : i32
    %c0_i32_0 = arith.constant 0 : i32
    %c0_i32_1 = arith.constant 0 : i32
    %c0_i32_2 = arith.constant 0 : i32
    return %c0_i32, %c0_i32_0, %c0_i32_1 : i32, i32, i32
  }
  func.func @transform_8(%arg0: i32, %arg1: i32) -> (i32, i32) {
    %c0_i32 = arith.constant 0 : i32
    %c0_i32_0 = arith.constant 0 : i32
    %c0_i32_1 = arith.constant 0 : i32
    return %c0_i32, %c0_i32_0 : i32, i32
  }
  func.func @transform_9(%arg0: i32, %arg1: i32) -> (i32, i32, i32) {
    %c0_i32 = arith.constant 0 : i32
    %c0_i32_0 = arith.constant 0 : i32
    return %arg0, %arg1, %c0_i32 : i32, i32, i32
  }
}

</mosaic_0001>

<llo_original>
// kernel: tpu_custom_call.1
$region0: #{tpu_custom_call.1}
  #allocation0 [shape = 'u32[]', space=smem, size = 0x4, offset = 0x4, fixed_abs, tag = 'smem constant byte address 0x4 - core index']
  #allocation1 [shape = 'u32[144,128]{1,0:T(1,128)}', space=vmem, size = 0x12000, scoped, tag = 'internal scratch']
  %s0 = inlined_call_operand.hbm [shape: f32[2,8,56], index: 0, kind: input, shape index: {}]
  %s1 = inlined_call_operand.hbm [shape: f32[2,8,128], index: 1, kind: input, shape index: {}]
  %s2 = inlined_call_operand.hbm [shape: f32[2,1,8,56], index: 2, kind: input, shape index: {}]
  %s3 = inlined_call_operand.hbm [shape: f32[2,1,8,128], index: 3, kind: input, shape index: {}]
  %s4 = inlined_call_operand.vmem [shape: f32[8,128], index: 4, kind: input, shape index: {}]
  %s5 = inlined_call_operand.hbm [shape: f32[56,128], index: 5, kind: input, shape index: {}]
  %s6 = inlined_call_operand.hbm [shape: f32[128,128], index: 6, kind: input, shape index: {}]
  %s7 = inlined_call_operand.hbm [shape: f32[3,128,128], index: 7, kind: input, shape index: {}]
  %s8 = inlined_call_operand.hbm [shape: f32[128,128], index: 8, kind: input, shape index: {}]
  %s9 = inlined_call_operand.hbm [shape: f32[2,8,128], index: 9, kind: output, shape index: {}]
  %s10 = sld [smem:[#allocation0]]
  $region101: #{tpu_custom_call.1} parent=0
    _
  %s12 = ssub.s32 1, %s10
  %s13 = scalar_select 0, %s12, %s10
  $region1: #{tpu_custom_call.1} parent=0
    #allocation2 [shape = 'u8[8192]{0}', space=vmem, size = 0x2000, scoped, tag = 'input window, operand 0']
    #allocation3 [shape = 's32[2]{0}', space=sflag, size = 0x8, scoped, tag = 'scoped memory for tpu_custom_call.1']
    #allocation4 [shape = 's32[2]{0}', space=sflag, size = 0x8, scoped, tag = 'scoped memory for tpu_custom_call.1']
    #allocation5 [shape = 'u8[8192]{0}', space=vmem, size = 0x2000, scoped, tag = 'input window, operand 1']
    #allocation6 [shape = 's32[2]{0}', space=sflag, size = 0x8, scoped, tag = 'scoped memory for tpu_custom_call.1']
    #allocation7 [shape = 'u8[8192]{0}', space=vmem, size = 0x2000, scoped, tag = 'input window, operand 2']
    #allocation8 [shape = 'u8[8192]{0}', space=vmem, size = 0x2000, scoped, tag = 'input window, operand 3']
    #allocation9 [shape = 's32[2]{0}', space=sflag, size = 0x8, scoped, tag = 'scoped memory for tpu_custom_call.1']
    #allocation10 [shape = 'u8[28672]{0}', space=vmem, size = 0x7000, scoped, tag = 'input window, operand 5, single buffered']
    #allocation11 [shape = 'u8[65536]{0}', space=vmem, size = 0x10000, scoped, tag = 'input window, operand 6, single buffered']
    #allocation12 [shape = 's32[1]{0}', space=sflag, size = 0x4, scoped, tag = 'scoped memory for tpu_custom_call.1']
    #allocation13 [shape = 'u8[196608]{0}', space=vmem, size = 0x30000, scoped, tag = 'input window, operand 7, single buffered']
    #allocation14 [shape = 'u8[65536]{0}', space=vmem, size = 0x10000, scoped, tag = 'input window, operand 8, single buffered']
    #allocation15 [shape = 's32[1]{0}', space=sflag, size = 0x4, scoped, tag = 'scoped memory for tpu_custom_call.1']
    #allocation16 [shape = 'u8[8192]{0}', space=vmem, size = 0x2000, scoped, tag = 'output window, operand 0']
    %14 = vsyncpa [#allocation3], 0
    %s15 = scalar_lea.sflag [#allocation3], 1
    %16 = vsyncpa %s15, 0
    %17 = vsyncpa [#allocation6], 0
    %s18 = scalar_lea.sflag [#allocation6], 1
    %19 = vsyncpa %s18, 0
    %20 = vsyncpa [#allocation9], 0
    %s21 = scalar_lea.sflag [#allocation9], 1
    %22 = vsyncpa %s21, 0
    %23 = vsyncpa [#allocation12], 0
    %24 = vsyncpa [#allocation15], 0
    %25 = vsyncpa [#allocation4], 0
    %s26 = scalar_lea.sflag [#allocation4], 1
    %27 = vsyncpa %s26, 0
    loop: start=0, step=1, limit=4
    $region2: #{tpu_custom_call.1} parent=1 // loop_pre_header
      _
    $region3: #{tpu_custom_call.1} parent=1 // loop_header
      %s29 = sphi 0, %s33
      %p30 = scmp.ge.s32.totalorder %s29, 4
      %s36 = sphi 0, %s48
      %s37 = sphi 0, %s44
      %s38 = sphi 0, %s36
      %s39 = sphi 0, %s37
      %s40 = sphi 0, %s38
      %s41 = sphi 0, %s39
      %s53 = sphi 0, %s55
      %s56 = sphi 0, %s53
      %s57 = sphi 0, %s56
      %s73 = sphi 0, %s57
      %s81 = sphi 0, %s83
      %s84 = sphi 0, %s81
      %s85 = sphi 0, %s84
      %s101 = sphi 0, %s85
      %s109 = sphi 0, %s111
      %s112 = sphi 0, %s109
      %s113 = sphi 0, %s112
      %s129 = sphi 0, %s113
      %s137 = sphi 0, %s139
      %s140 = sphi 0, %s137
      %s141 = sphi 0, %s140
      %s157 = sphi 0, %s141
      %s161 = sphi 0, %s161
      %s163 = sphi 0, %s161
      %s164 = sphi 0, %s163
      %s178 = sphi 0, %s164
      %s182 = sphi 0, %s182
      %s184 = sphi 0, %s182
      %s185 = sphi 0, %s184
      %s199 = sphi 0, %s185
      %s203 = sphi 0, %s203
      %s205 = sphi 0, %s203
      %s206 = sphi 0, %s205
      %s220 = sphi 0, %s206
      %s224 = sphi 0, %s224
      %s226 = sphi 0, %s224
      %s227 = sphi 0, %s226
      %s241 = sphi 0, %s227
      %s245 = sphi 0, %s245
      %s247 = sphi 0, %s245
      %s248 = sphi 0, %s247
      %s262 = sphi 0, %s248
      %s270 = sphi 0, %s272
      %s273 = sphi 0, %s270
      %s274 = sphi 0, %s273
      %s290 = sphi 0, %s274
    $region4: #{tpu_custom_call.1} parent=1 // loop_header_branch
      %32 = sbr.rel (%p30) target = $region8
    $region5: #{tpu_custom_call.1} parent=1 // loop_body
      %s34 = ssub.s32 %s29, 1
      %s35 = ssub.s32 %s29, 2
      %s42 = sadd.s32 1, %s37
      %p43 = scmp.ge.s32.totalorder %s42, 1
      %s44 = scalar_select %p43, 0, %s42
      %s45 = sadd.s32 1, %s36
      %s46 = scalar_select %p43, %s45, %s36
      %p47 = scmp.ge.s32.totalorder %s46, 2
      %s48 = scalar_select %p47, 0, %s46
      %s49 = ssub.s32 %s36, %s48
      %s50 = ssub.s32 %s37, %s44
      %s51 = sor.u32 %s49, %s50
      %p52 = scmp.eq.s32.totalorder %s51, 0
      %s54 = sadd.s32 %s53, 1
      %s55 = scalar_select %p52, %s53, %s54
      %p58 = pneg %p52
      %p59 = scmp.eq.s32.totalorder %s29, 1
      %p60 = por %p58, %p59
      %p61 = scmp.ne.s32.totalorder %s53, %s56
      %p62 = scmp.eq.s32.totalorder %s29, 0
      %p63 = por %p61, %p62
      %p64 = scmp.ne.s32.totalorder %s53, %s56
      %p65 = scmp.eq.s32.totalorder %s34, 1
      %p66 = por %p64, %p65
      %p67 = scmp.ne.s32.totalorder %s56, %s57
      %p68 = scmp.eq.s32.totalorder %s34, 0
      %p69 = por %p67, %p68
      %p70 = scmp.ne.s32.totalorder %s56, %s57
      %p71 = scmp.eq.s32.totalorder %s35, 1
      %p72 = por %p70, %p71
      %p74 = scmp.ne.s32.totalorder %s57, %s73
      %p75 = scmp.eq.s32.totalorder %s35, 0
      %p76 = por %p74, %p75
      %s77 = ssub.s32 %s36, %s48
      %s78 = ssub.s32 %s37, %s44
      %s79 = sor.u32 %s77, %s78
      %p80 = scmp.eq.s32.totalorder %s79, 0
      %s82 = sadd.s32 %s81, 1
      %s83 = scalar_select %p80, %s81, %s82
      %p86 = pneg %p80
      %p87 = scmp.eq.s32.totalorder %s29, 1
      %p88 = por %p86, %p87
      %p89 = scmp.ne.s32.totalorder %s81, %s84
      %p90 = scmp.eq.s32.totalorder %s29, 0
      %p91 = por %p89, %p90
      %p92 = scmp.ne.s32.totalorder %s81, %s84
      %p93 = scmp.eq.s32.totalorder %s34, 1
      %p94 = por %p92, %p93
      %p95 = scmp.ne.s32.totalorder %s84, %s85
      %p96 = scmp.eq.s32.totalorder %s34, 0
      %p97 = por %p95, %p96
      %p98 = scmp.ne.s32.totalorder %s84, %s85
      %p99 = scmp.eq.s32.totalorder %s35, 1
      %p100 = por %p98, %p99
      %p102 = scmp.ne.s32.totalorder %s85, %s101
      %p103 = scmp.eq.s32.totalorder %s35, 0
      %p104 = por %p102, %p103
      %s105 = ssub.s32 %s36, %s48
      %s106 = ssub.s32 %s37, %s44
      %s107 = sor.u32 %s105, %s106
      %p108 = scmp.eq.s32.totalorder %s107, 0
      %s110 = sadd.s32 %s109, 1
      %s111 = scalar_select %p108, %s109, %s110
      %p114 = pneg %p108
      %p115 = scmp.eq.s32.totalorder %s29, 1
      %p116 = por %p114, %p115
      %p117 = scmp.ne.s32.totalorder %s109, %s112
      %p118 = scmp.eq.s32.totalorder %s29, 0
      %p119 = por %p117, %p118
      %p120 = scmp.ne.s32.totalorder %s109, %s112
      %p121 = scmp.eq.s32.totalorder %s34, 1
      %p122 = por %p120, %p121
      %p123 = scmp.ne.s32.totalorder %s112, %s113
      %p124 = scmp.eq.s32.totalorder %s34, 0
      %p125 = por %p123, %p124
      %p126 = scmp.ne.s32.totalorder %s112, %s113
      %p127 = scmp.eq.s32.totalorder %s35, 1
      %p128 = por %p126, %p127
      %p130 = scmp.ne.s32.totalorder %s113, %s129
      %p131 = scmp.eq.s32.totalorder %s35, 0
      %p132 = por %p130, %p131
      %s133 = ssub.s32 %s36, %s48
      %s134 = ssub.s32 %s37, %s44
      %s135 = sor.u32 %s133, %s134
      %p136 = scmp.eq.s32.totalorder %s135, 0
      %s138 = sadd.s32 %s137, 1
      %s139 = scalar_select %p136, %s137, %s138
      %p142 = pneg %p136
      %p143 = scmp.eq.s32.totalorder %s29, 1
      %p144 = por %p142, %p143
      %p145 = scmp.ne.s32.totalorder %s137, %s140
      %p146 = scmp.eq.s32.totalorder %s29, 0
      %p147 = por %p145, %p146
      %p148 = scmp.ne.s32.totalorder %s137, %s140
      %p149 = scmp.eq.s32.totalorder %s34, 1
      %p150 = por %p148, %p149
      %p151 = scmp.ne.s32.totalorder %s140, %s141
      %p152 = scmp.eq.s32.totalorder %s34, 0
      %p153 = por %p151, %p152
      %p154 = scmp.ne.s32.totalorder %s140, %s141
      %p155 = scmp.eq.s32.totalorder %s35, 1
      %p156 = por %p154, %p155
      %p158 = scmp.ne.s32.totalorder %s141, %s157
      %p159 = scmp.eq.s32.totalorder %s35, 0
      %p160 = por %p158, %p159
      %s162 = sadd.s32 %s161, 1
      %p165 = scmp.eq.s32.totalorder %s29, 1
      %p166 = scmp.ne.s32.totalorder %s161, %s163
      %p167 = scmp.eq.s32.totalorder %s29, 0
      %p168 = por %p166, %p167
      %p169 = scmp.ne.s32.totalorder %s161, %s163
      %p170 = scmp.eq.s32.totalorder %s34, 1
      %p171 = por %p169, %p170
      %p172 = scmp.ne.s32.totalorder %s163, %s164
      %p173 = scmp.eq.s32.totalorder %s34, 0
      %p174 = por %p172, %p173
      %p175 = scmp.ne.s32.totalorder %s163, %s164
      %p176 = scmp.eq.s32.totalorder %s35, 1
      %p177 = por %p175, %p176
      %p179 = scmp.ne.s32.totalorder %s164, %s178
      %p180 = scmp.eq.s32.totalorder %s35, 0
      %p181 = por %p179, %p180
      %s183 = sadd.s32 %s182, 1
      %p186 = scmp.eq.s32.totalorder %s29, 1
      %p187 = scmp.ne.s32.totalorder %s182, %s184
      %p188 = scmp.eq.s32.totalorder %s29, 0
      %p189 = por %p187, %p188
      %p190 = scmp.ne.s32.totalorder %s182, %s184
      %p191 = scmp.eq.s32.totalorder %s34, 1
      %p192 = por %p190, %p191
      %p193 = scmp.ne.s32.totalorder %s184, %s185
      %p194 = scmp.eq.s32.totalorder %s34, 0
      %p195 = por %p193, %p194
      %p196 = scmp.ne.s32.totalorder %s184, %s185
      %p197 = scmp.eq.s32.totalorder %s35, 1
      %p198 = por %p196, %p197
      %p200 = scmp.ne.s32.totalorder %s185, %s199
      %p201 = scmp.eq.s32.totalorder %s35, 0
      %p202 = por %p200, %p201
      %s204 = sadd.s32 %s203, 1
      %p207 = scmp.eq.s32.totalorder %s29, 1
      %p208 = scmp.ne.s32.totalorder %s203, %s205
      %p209 = scmp.eq.s32.totalorder %s29, 0
      %p210 = por %p208, %p209
      %p211 = scmp.ne.s32.totalorder %s203, %s205
      %p212 = scmp.eq.s32.totalorder %s34, 1
      %p213 = por %p211, %p212
      %p214 = scmp.ne.s32.totalorder %s205, %s206
      %p215 = scmp.eq.s32.totalorder %s34, 0
      %p216 = por %p214, %p215
      %p217 = scmp.ne.s32.totalorder %s205, %s206
      %p218 = scmp.eq.s32.totalorder %s35, 1
      %p219 = por %p217, %p218
      %p221 = scmp.ne.s32.totalorder %s206, %s220
      %p222 = scmp.eq.s32.totalorder %s35, 0
      %p223 = por %p221, %p222
      %s225 = sadd.s32 %s224, 1
      %p228 = scmp.eq.s32.totalorder %s29, 1
      %p229 = scmp.ne.s32.totalorder %s224, %s226
      %p230 = scmp.eq.s32.totalorder %s29, 0
      %p231 = por %p229, %p230
      %p232 = scmp.ne.s32.totalorder %s224, %s226
      %p233 = scmp.eq.s32.totalorder %s34, 1
      %p234 = por %p232, %p233
      %p235 = scmp.ne.s32.totalorder %s226, %s227
      %p236 = scmp.eq.s32.totalorder %s34, 0
      %p237 = por %p235, %p236
      %p238 = scmp.ne.s32.totalorder %s226, %s227
      %p239 = scmp.eq.s32.totalorder %s35, 1
      %p240 = por %p238, %p239
      %p242 = scmp.ne.s32.totalorder %s227, %s241
      %p243 = scmp.eq.s32.totalorder %s35, 0
      %p244 = por %p242, %p243
      %s246 = sadd.s32 %s245, 1
      %p249 = scmp.eq.s32.totalorder %s29, 1
      %p250 = scmp.ne.s32.totalorder %s245, %s247
      %p251 = scmp.eq.s32.totalorder %s29, 0
      %p252 = por %p250, %p251
      %p253 = scmp.ne.s32.totalorder %s245, %s247
      %p254 = scmp.eq.s32.totalorder %s34, 1
      %p255 = por %p253, %p254
      %p256 = scmp.ne.s32.totalorder %s247, %s248
      %p257 = scmp.eq.s32.totalorder %s34, 0
      %p258 = por %p256, %p257
      %p259 = scmp.ne.s32.totalorder %s247, %s248
      %p260 = scmp.eq.s32.totalorder %s35, 1
      %p261 = por %p259, %p260
      %p263 = scmp.ne.s32.totalorder %s248, %s262
      %p264 = scmp.eq.s32.totalorder %s35, 0
      %p265 = por %p263, %p264
      %s266 = ssub.s32 %s36, %s48
      %s267 = ssub.s32 %s37, %s44
      %s268 = sor.u32 %s266, %s267
      %p269 = scmp.eq.s32.totalorder %s268, 0
      %s271 = sadd.s32 %s270, 1
      %s272 = scalar_select %p269, %s270, %s271
      %p275 = pneg %p269
      %p276 = scmp.eq.s32.totalorder %s29, 1
      %p277 = por %p275, %p276
      %p278 = scmp.ne.s32.totalorder %s270, %s273
      %p279 = scmp.eq.s32.totalorder %s29, 0
      %p280 = por %p278, %p279
      %p281 = scmp.ne.s32.totalorder %s270, %s273
      %p282 = scmp.eq.s32.totalorder %s34, 1
      %p283 = por %p281, %p282
      %p284 = scmp.ne.s32.totalorder %s273, %s274
      %p285 = scmp.eq.s32.totalorder %s34, 0
      %p286 = por %p284, %p285
      %p287 = scmp.ne.s32.totalorder %s273, %s274
      %p288 = scmp.eq.s32.totalorder %s35, 1
      %p289 = por %p287, %p288
      %p291 = scmp.ne.s32.totalorder %s274, %s290
      %p292 = scmp.eq.s32.totalorder %s35, 0
      %p293 = por %p291, %p292
      %p294 = scmp.le.s32.totalorder 1, %s29
      %p295 = scmp.lt.s32.totalorder %s29, 3
      %p296 = pnand %p294, %p295
      %p297 = pneg %p296
      // Predicated region
      $region9: #{tpu_custom_call.1} parent=5 // pred_check
        _
      $region10: #{tpu_custom_call.1} parent=5 // pred_check_branch
        %299 = sbr.rel (%p296) target = $region12
      $region11: #{tpu_custom_call.1} parent=5 // pred_region
        %s300 = ssub.s32 %s29, 1
        // Predicated region
        $region13: #{tpu_custom_call.1} parent=11 // pred_check
          %p301 = pneg %p174
        $region14: #{tpu_custom_call.1} parent=11 // pred_check_branch
          %303 = sbr.rel (%p301) target = $region16
        $region15: #{tpu_custom_call.1} parent=11 // pred_region
          _
        $region16: #{tpu_custom_call.1} parent=11 // pred_fallthru
          _
        // Predicated region
        $region17: #{tpu_custom_call.1} parent=11 // pred_check
          %p304 = pneg %p195
        $region18: #{tpu_custom_call.1} parent=11 // pred_check_branch
          %306 = sbr.rel (%p304) target = $region20
        $region19: #{tpu_custom_call.1} parent=11 // pred_region
          %s308 = ssub.s32 896, 896
          %309 = vsyncadd [#allocation9], %s308
          %s310 = sshll.u32 [#allocation10], 4
          %s311 = int_to_ptr.vmem [resolvable:$true] %s310
          %316 = dma.hbm_to_vmem [thread:$0]  %s5, 896, %s311, [#allocation9], 128, 128, 8
        $region20: #{tpu_custom_call.1} parent=11 // pred_fallthru
          _
        // Predicated region
        $region21: #{tpu_custom_call.1} parent=11 // pred_check
          %p317 = pneg %p216
        $region22: #{tpu_custom_call.1} parent=11 // pred_check_branch
          %319 = sbr.rel (%p317) target = $region24
        $region23: #{tpu_custom_call.1} parent=11 // pred_region
          %s321 = ssub.s32 2048, 2048
          %322 = vsyncadd [#allocation12], %s321
          %s323 = sshll.u32 [#allocation11], 4
          %s324 = int_to_ptr.vmem [resolvable:$true] %s323
          %329 = dma.hbm_to_vmem [thread:$0]  %s6, 2048, %s324, [#allocation12], 128, 128, 8
        $region24: #{tpu_custom_call.1} parent=11 // pred_fallthru
          _
        // Predicated region
        $region25: #{tpu_custom_call.1} parent=11 // pred_check
          %p330 = pneg %p237
        $region26: #{tpu_custom_call.1} parent=11 // pred_check_branch
          %332 = sbr.rel (%p330) target = $region28
        $region27: #{tpu_custom_call.1} parent=11 // pred_region
          %s334 = ssub.s32 6144, 6144
          %335 = vsyncadd [#allocation12], %s334
          %s336 = sshll.u32 [#allocation13], 4
          %s337 = int_to_ptr.vmem [resolvable:$true] %s336
          %342 = dma.hbm_to_vmem [thread:$0]  %s7, 6144, %s337, [#allocation12], 128, 128, 8
        $region28: #{tpu_custom_call.1} parent=11 // pred_fallthru
          _
        // Predicated region
        $region29: #{tpu_custom_call.1} parent=11 // pred_check
          %p343 = pneg %p258
        $region30: #{tpu_custom_call.1} parent=11 // pred_check_branch
          %345 = sbr.rel (%p343) target = $region32
        $region31: #{tpu_custom_call.1} parent=11 // pred_region
          %s347 = ssub.s32 2048, 2048
          %348 = vsyncadd [#allocation15], %s347
          %s349 = sshll.u32 [#allocation14], 4
          %s350 = int_to_ptr.vmem [resolvable:$true] %s349
          %355 = dma.hbm_to_vmem [thread:$0]  %s8, 2048, %s350, [#allocation15], 128, 128, 8
        $region32: #{tpu_custom_call.1} parent=11 // pred_fallthru
          _
      $region12: #{tpu_custom_call.1} parent=5 // pred_fallthru
        _
      %p356 = scmp.lt.s32.totalorder %s29, 2
      // Predicated region
      $region33: #{tpu_custom_call.1} parent=5 // pred_check
        %p357 = pneg %p356
      $region34: #{tpu_custom_call.1} parent=5 // pred_check_branch
        %359 = sbr.rel (%p357) target = $region36
      $region35: #{tpu_custom_call.1} parent=5 // pred_region
        // Predicated region
        $region37: #{tpu_custom_call.1} parent=35 // pred_check
          %p360 = pneg %p63
        $region38: #{tpu_custom_call.1} parent=35 // pred_check_branch
          %362 = sbr.rel (%p360) target = $region40
        $region39: #{tpu_custom_call.1} parent=35 // pred_region
          %s363 = sand.u32 %s53, 1
          %s364 = scalar_lea.sflag [#allocation3], %s363
          %s365 = sand.u32 %s53, 1
          %s366 = smul.addr %s365, 8
          %s367 = scalar_lea.vmem [#allocation2], %s366
          %s369 = ssub.s32 128, 128
          %370 = vsyncadd %s364, %s369
          %s371 = sadd.s32 %s37, %s36
          %s372 = smul.addr %s371, 128
          %s373 = scalar_lea.hbm %s0, %s372
          %s375 = sshll.u32 %s367, 4
          %s376 = int_to_ptr.vmem [resolvable:$true] %s375
          %378 = dma.hbm_to_vmem [thread:$0]  %s373, 128, %s376, %s364
        $region40: #{tpu_custom_call.1} parent=35 // pred_fallthru
          _
        // Predicated region
        $region41: #{tpu_custom_call.1} parent=35 // pred_check
          %p379 = pneg %p91
        $region42: #{tpu_custom_call.1} parent=35 // pred_check_branch
          %381 = sbr.rel (%p379) target = $region44
        $region43: #{tpu_custom_call.1} parent=35 // pred_region
          %s382 = sand.u32 %s29, 1
          %s383 = scalar_lea.sflag [#allocation6], %s382
          %s384 = sand.u32 %s81, 1
          %s385 = smul.addr %s384, 8
          %s386 = scalar_lea.vmem [#allocation5], %s385
          %s388 = ssub.s32 128, 128
          %389 = vsyncadd %s383, %s388
          %s390 = sadd.s32 %s37, %s36
          %s391 = smul.addr %s390, 128
          %s392 = scalar_lea.hbm %s1, %s391
          %s394 = sshll.u32 %s386, 4
          %s395 = int_to_ptr.vmem [resolvable:$true] %s394
          %397 = dma.hbm_to_vmem [thread:$0]  %s392, 128, %s395, %s383
        $region44: #{tpu_custom_call.1} parent=35 // pred_fallthru
          _
        // Predicated region
        $region45: #{tpu_custom_call.1} parent=35 // pred_check
          %p398 = pneg %p119
        $region46: #{tpu_custom_call.1} parent=35 // pred_check_branch
          %400 = sbr.rel (%p398) target = $region48
        $region47: #{tpu_custom_call.1} parent=35 // pred_region
          %s401 = sand.u32 %s29, 1
          %s402 = scalar_lea.sflag [#allocation6], %s401
          %s403 = sand.u32 %s109, 1
          %s404 = smul.addr %s403, 8
          %s405 = scalar_lea.vmem [#allocation7], %s404
          %s407 = ssub.s32 128, 128
          %408 = vsyncadd %s402, %s407
          %s409 = sadd.s32 %s37, %s36
          %s410 = smul.addr %s409, 128
          %s411 = scalar_lea.hbm %s2, %s410
          %s413 = sshll.u32 %s405, 4
          %s414 = int_to_ptr.vmem [resolvable:$true] %s413
          %416 = dma.hbm_to_vmem [thread:$0]  %s411, 128, %s414, %s402
        $region48: #{tpu_custom_call.1} parent=35 // pred_fallthru
          _
        // Predicated region
        $region49: #{tpu_custom_call.1} parent=35 // pred_check
          %p417 = pneg %p147
        $region50: #{tpu_custom_call.1} parent=35 // pred_check_branch
          %419 = sbr.rel (%p417) target = $region52
        $region51: #{tpu_custom_call.1} parent=35 // pred_region
          %s420 = sand.u32 %s29, 1
          %s421 = scalar_lea.sflag [#allocation9], %s420
          %s422 = sand.u32 %s137, 1
          %s423 = smul.addr %s422, 8
          %s424 = scalar_lea.vmem [#allocation8], %s423
          %s426 = ssub.s32 128, 128
          %427 = vsyncadd %s421, %s426
          %s428 = sadd.s32 %s37, %s36
          %s429 = smul.addr %s428, 128
          %s430 = scalar_lea.hbm %s3, %s429
          %s432 = sshll.u32 %s424, 4
          %s433 = int_to_ptr.vmem [resolvable:$true] %s432
          %435 = dma.hbm_to_vmem [thread:$0]  %s430, 128, %s433, %s421
        $region52: #{tpu_custom_call.1} parent=35 // pred_fallthru
          _
      $region36: #{tpu_custom_call.1} parent=5 // pred_fallthru
        _
      %p436 = scmp.le.s32.totalorder 1, %s29
      %p437 = scmp.lt.s32.totalorder %s29, 3
      %p438 = pnand %p436, %p437
      %p439 = pneg %p438
      // Predicated region
      $region53: #{tpu_custom_call.1} parent=5 // pred_check
        _
      $region54: #{tpu_custom_call.1} parent=5 // pred_check_branch
        %441 = sbr.rel (%p438) target = $region56
      $region55: #{tpu_custom_call.1} parent=5 // pred_region
        %s442 = ssub.s32 %s29, 1
        %s443 = sand.u32 %s56, 1
        %s444 = scalar_lea.sflag [#allocation3], %s443
        %s445 = sand.u32 %s56, 1
        %s446 = smul.addr %s445, 8
        %s447 = scalar_lea.vmem [#allocation2], %s446
        // Predicated region
        $region57: #{tpu_custom_call.1} parent=55 // pred_check
          %p448 = pneg %p69
        $region58: #{tpu_custom_call.1} parent=55 // pred_check_branch
          %450 = sbr.rel (%p448) target = $region60
        $region59: #{tpu_custom_call.1} parent=55 // pred_region
          %451 = dma.done %s444, 128
        $region60: #{tpu_custom_call.1} parent=55 // pred_fallthru
          _
        %s452 = sand.u32 %s34, 1
        %s453 = scalar_lea.sflag [#allocation6], %s452
        %s454 = sand.u32 %s84, 1
        %s455 = smul.addr %s454, 8
        %s456 = scalar_lea.vmem [#allocation5], %s455
        // Predicated region
        $region61: #{tpu_custom_call.1} parent=55 // pred_check
          %p457 = pneg %p97
        $region62: #{tpu_custom_call.1} parent=55 // pred_check_branch
          %459 = sbr.rel (%p457) target = $region64
        $region63: #{tpu_custom_call.1} parent=55 // pred_region
          %460 = dma.done %s453, 128
        $region64: #{tpu_custom_call.1} parent=55 // pred_fallthru
          _
        %s461 = sand.u32 %s34, 1
        %s462 = scalar_lea.sflag [#allocation6], %s461
        %s463 = sand.u32 %s112, 1
        %s464 = smul.addr %s463, 8
        %s465 = scalar_lea.vmem [#allocation7], %s464
        // Predicated region
        $region65: #{tpu_custom_call.1} parent=55 // pred_check
          %p466 = pneg %p125
        $region66: #{tpu_custom_call.1} parent=55 // pred_check_branch
          %468 = sbr.rel (%p466) target = $region68
        $region67: #{tpu_custom_call.1} parent=55 // pred_region
          %469 = dma.done %s462, 128
        $region68: #{tpu_custom_call.1} parent=55 // pred_fallthru
          _
        %s470 = sand.u32 %s34, 1
        %s471 = scalar_lea.sflag [#allocation9], %s470
        %s472 = sand.u32 %s140, 1
        %s473 = smul.addr %s472, 8
        %s474 = scalar_lea.vmem [#allocation8], %s473
        // Predicated region
        $region69: #{tpu_custom_call.1} parent=55 // pred_check
          %p475 = pneg %p153
        $region70: #{tpu_custom_call.1} parent=55 // pred_check_branch
          %477 = sbr.rel (%p475) target = $region72
        $region71: #{tpu_custom_call.1} parent=55 // pred_region
          %478 = dma.done %s471, 128
        $region72: #{tpu_custom_call.1} parent=55 // pred_fallthru
          _
        // Predicated region
        $region73: #{tpu_custom_call.1} parent=55 // pred_check
          %p479 = pneg %p195
        $region74: #{tpu_custom_call.1} parent=55 // pred_check_branch
          %481 = sbr.rel (%p479) target = $region76
        $region75: #{tpu_custom_call.1} parent=55 // pred_region
          %482 = dma.done [#allocation9], 896
        $region76: #{tpu_custom_call.1} parent=55 // pred_fallthru
          _
        // Predicated region
        $region77: #{tpu_custom_call.1} parent=55 // pred_check
          %p483 = pneg %p216
        $region78: #{tpu_custom_call.1} parent=55 // pred_check_branch
          %485 = sbr.rel (%p483) target = $region80
        $region79: #{tpu_custom_call.1} parent=55 // pred_region
          %486 = dma.done [#allocation12], 2048
        $region80: #{tpu_custom_call.1} parent=55 // pred_fallthru
          _
        // Predicated region
        $region81: #{tpu_custom_call.1} parent=55 // pred_check
          %p487 = pneg %p237
        $region82: #{tpu_custom_call.1} parent=55 // pred_check_branch
          %489 = sbr.rel (%p487) target = $region84
        $region83: #{tpu_custom_call.1} parent=55 // pred_region
          %490 = dma.done [#allocation12], 6144
        $region84: #{tpu_custom_call.1} parent=55 // pred_fallthru
          _
        // Predicated region
        $region85: #{tpu_custom_call.1} parent=55 // pred_check
          %p491 = pneg %p258
        $region86: #{tpu_custom_call.1} parent=55 // pred_check_branch
          %493 = sbr.rel (%p491) target = $region88
        $region87: #{tpu_custom_call.1} parent=55 // pred_region
          %494 = dma.done [#allocation15], 2048
        $region88: #{tpu_custom_call.1} parent=55 // pred_fallthru
          _
        %s495 = sand.u32 %s56, 1
        %s496 = scalar_lea.sflag [#allocation3], %s495
        %s497 = sand.u32 %s56, 1
        %s498 = smul.addr %s497, 8
        %s499 = scalar_lea.vmem [#allocation2], %s498
        %p500 = pneg %p69
        %p501 = pneg %p66
        %s502 = sand.u32 %s34, 1
        %s503 = scalar_lea.sflag [#allocation6], %s502
        %s504 = sand.u32 %s84, 1
        %s505 = smul.addr %s504, 8
        %s506 = scalar_lea.vmem [#allocation5], %s505
        %p507 = pneg %p97
        %p508 = pneg %p94
        %s509 = sand.u32 %s34, 1
        %s510 = scalar_lea.sflag [#allocation6], %s509
        %s511 = sand.u32 %s112, 1
        %s512 = smul.addr %s511, 8
        %s513 = scalar_lea.vmem [#allocation7], %s512
        %p514 = pneg %p125
        %p515 = pneg %p122
        %s516 = sand.u32 %s34, 1
        %s517 = scalar_lea.sflag [#allocation9], %s516
        %s518 = sand.u32 %s140, 1
        %s519 = smul.addr %s518, 8
        %s520 = scalar_lea.vmem [#allocation8], %s519
        %p521 = pneg %p153
        %p522 = pneg %p150
        %p523 = pneg %p174
        %p524 = pneg %p171
        %p525 = pneg %p195
        %p526 = pneg %p192
        %p527 = pneg %p216
        %p528 = pneg %p213
        %p529 = pneg %p237
        %p530 = pneg %p234
        %p531 = pneg %p258
        %p532 = pneg %p255
        %p533 = pneg %p286
        %p534 = pneg %p283
        %s535 = sand.u32 %s273, 1
        %s536 = scalar_lea.sflag [#allocation4], %s535
        %s537 = sand.u32 %s273, 1
        %s538 = smul.addr %s537, 8
        %s539 = scalar_lea.vmem [#allocation16], %s538
        %v540 = vld [vmem:[%s4] sm:$0x1]
        %v541 = vld [vmem:[%s4 + $0x1] sm:$0x1]
        %v542 = vld [vmem:[%s4 + $0x2] sm:$0x1]
        %v543 = vld [vmem:[%s4 + $0x3] sm:$0x1]
        %v544 = vld [vmem:[%s4 + $0x4] sm:$0x1]
        %v545 = vld [vmem:[%s4 + $0x5] sm:$0x1]
        %v546 = vld [vmem:[%s4 + $0x6] sm:$0x1]
        %v547 = vld [vmem:[#allocation10] sm:$0xff]
        %v548 = vld [vmem:[#allocation10 + $0x8] sm:$0xff]
        %v549 = vld [vmem:[#allocation10 + $0x10] sm:$0xff]
        %v550 = vld [vmem:[#allocation10 + $0x18] sm:$0xff]
        %v551 = vld [vmem:[#allocation10 + $0x20] sm:$0xff]
        %v552 = vld [vmem:[#allocation10 + $0x28] sm:$0xff]
        %v553 = vld [vmem:[#allocation10 + $0x30] sm:$0xff]
        %v554 = vld [vmem:[#allocation11] sm:$0xff]
        %v555 = vld [vmem:[#allocation11 + $0x8] sm:$0xff]
        %v556 = vld [vmem:[#allocation11 + $0x10] sm:$0xff]
        %v557 = vld [vmem:[#allocation11 + $0x18] sm:$0xff]
        %v558 = vld [vmem:[#allocation11 + $0x20] sm:$0xff]
        %v559 = vld [vmem:[#allocation11 + $0x28] sm:$0xff]
        %v560 = vld [vmem:[#allocation11 + $0x30] sm:$0xff]
        %v561 = vld [vmem:[#allocation11 + $0x38] sm:$0xff]
        %v562 = vld [vmem:[#allocation11 + $0x40] sm:$0xff]
        %v563 = vld [vmem:[#allocation11 + $0x48] sm:$0xff]
        %v564 = vld [vmem:[#allocation11 + $0x50] sm:$0xff]
        %v565 = vld [vmem:[#allocation11 + $0x58] sm:$0xff]
        %v566 = vld [vmem:[#allocation11 + $0x60] sm:$0xff]
        %v567 = vld [vmem:[#allocation11 + $0x68] sm:$0xff]
        %v568 = vld [vmem:[#allocation11 + $0x70] sm:$0xff]
        %v569 = vld [vmem:[#allocation11 + $0x78] sm:$0xff]
        %v570 = vld [vmem:[%s447] sm:$0xff]
        %v571 = vld [vmem:[%s456] sm:$0xff]
        %vm572 = vcmask 457728
        %v573 = vsel %vm572, %v570, 0.0
        %574 = vadd.xlane.f32.xlu0 %v573
        %v575 = vpop.xlane.xlu0 %574
        %576 = vadd.xlane.f32.xlu0 %v571
        %v577 = vpop.xlane.xlu0 %576
        %v578 = vadd.f32 %v575, %v577
        %v579 = vmul.f32 %v578, 0.0054347827
        %v580 = vsub.f32 %v570, %v579
        %v581 = vsub.f32 %v571, %v579
        %v582 = vmul.f32 %v580, %v580
        %v583 = vsel %vm572, %v582, 0.0
        %584 = vadd.xlane.f32.xlu0 %v583
        %v585 = vpop.xlane.xlu0 %584
        %v586 = vmul.f32 %v581, %v581
        %587 = vadd.xlane.f32.xlu0 %v586
        %v588 = vpop.xlane.xlu0 %587
        %v589 = vadd.f32 %v585, %v588
        %v590 = vmul.f32 %v589, 0.0054347827
        %v591 = vadd.f32 %v590, 1e-05
        %v592 = vrsqrt.pop %v591
        %v593 = vmul.f32 %v580, %v592
        %v594 = vlaneseq
        %v595 = vshrl.u32 %v594, 7
        %v596 = vsub.s32 0, %v595
        %v597 = vrot.slane %v540, %v596
        %v598 = vmul.f32 %v593, %v597
        %v599 = vlaneseq
        %v600 = vshrl.u32 %v599, 7
        %v601 = vsub.s32 0, %v600
        %v602 = vrot.slane %v542, %v601
        %v603 = vadd.f32 %v598, %v602
        %v604 = vmul.f32 %v581, %v592
        %v605 = vlaneseq
        %v606 = vshrl.u32 %v605, 7
        %v607 = vsub.s32 0, %v606
        %v608 = vrot.slane %v541, %v607
        %v609 = vmul.f32 %v604, %v608
        %v610 = vlaneseq
        %v611 = vshrl.u32 %v610, 7
        %v612 = vsub.s32 0, %v611
        %v613 = vrot.slane %v543, %v612
        %v614 = vadd.f32 %v609, %v613
        %615 = vmatprep.subr.mxu0 0.0
        %616 = vmatpush1.msra.mxu0 %v554
        %617 = vmatprep.subr.mxu0 0.0
        %618 = vmatpush1.msra.mxu0 %v555
        %619 = vmatprep.subr.mxu0 0.0
        %620 = vmatpush1.msra.mxu0 %v556
        %621 = vmatprep.subr.mxu0 0.0
        %622 = vmatpush1.msra.mxu0 %v557
        %623 = vmatprep.subr.mxu0 0.0
        %624 = vmatpush1.msra.mxu0 %v558
        %625 = vmatprep.subr.mxu0 0.0
        %626 = vmatpush1.msra.mxu0 %v559
        %627 = vmatprep.subr.mxu0 0.0
        %628 = vmatpush1.msra.mxu0 %v560
        %629 = vmatprep.subr.mxu0 0.0
        %630 = vmatpush1.msra.mxu0 %v561
        %631 = vmatprep.subr.mxu0 0.0
        %632 = vmatpush1.msra.mxu0 %v562
        %633 = vmatprep.subr.mxu0 0.0
        %634 = vmatpush1.msra.mxu0 %v563
        %635 = vmatprep.subr.mxu0 0.0
        %636 = vmatpush1.msra.mxu0 %v564
        %637 = vmatprep.subr.mxu0 0.0
        %638 = vmatpush1.msra.mxu0 %v565
        %639 = vmatprep.subr.mxu0 0.0
        %640 = vmatpush1.msra.mxu0 %v566
        %641 = vmatprep.subr.mxu0 0.0
        %642 = vmatpush1.msra.mxu0 %v567
        %643 = vmatprep.subr.mxu0 0.0
        %644 = vmatpush1.msra.mxu0 %v568
        %645 = vmatprep.subr.mxu0 0.0
        %646 = vmatpush1.msra.mxu0 %v569
        %647 = vmatprep.subr.mxu0 0.0
        %648 = vmatpush1.msra.mxu0 0.0
        %649 = vmatprep.subr.mxu0 0.0
        %650 = vmatpush1.msra.mxu0 0.0
        %651 = vmatprep.subr.mxu0 0.0
        %652 = vmatpush1.msra.mxu0 0.0
        %653 = vmatprep.subr.mxu0 0.0
        %654 = vmatpush1.msra.mxu0 0.0
        %655 = vmatprep.subr.mxu0 0.0
        %656 = vmatpush1.msra.mxu0 0.0
        %657 = vmatprep.subr.mxu0 0.0
        %658 = vmatpush1.msra.mxu0 0.0
        %659 = vmatprep.subr.mxu0 0.0
        %660 = vmatpush1.msra.mxu0 0.0
        %661 = vmatprep.subr.mxu0 0.0
        %662 = vmatpush1.msra.mxu0 0.0
        %663 = vmatprep.subr.mxu0 0.0
        %664 = vmatpush1.msra.mxu0 0.0
        %665 = vmatprep.subr.mxu0 0.0
        %666 = vmatpush1.msra.mxu0 0.0
        %667 = vmatprep.subr.mxu0 0.0
        %668 = vmatpush1.msra.mxu0 0.0
        %669 = vmatprep.subr.mxu0 0.0
        %670 = vmatpush1.msra.mxu0 0.0
        %671 = vmatprep.subr.mxu0 0.0
        %672 = vmatpush1.msra.mxu0 0.0
        %673 = vmatprep.subr.mxu0 0.0
        %674 = vmatpush1.msra.mxu0 0.0
        %675 = vmatprep.subr.mxu0 0.0
        %676 = vmatpush1.msra.mxu0 0.0
        %677 = vmatprep.subr.mxu0 0.0
        %678 = vmatpush1.msra.mxu0 0.0
        %679 = vmatprep.mubr.f32.mxu0 0.0
        %680 = vmatmul.mubr.f32.gmra.mrb[0].mxu0 %v614
        %v681 = vpop.f32.mrb[0].mxu0
        %v682 = vadd.f32 0.0, %v681
        %v683 = vpop.f32.mrb[0].mxu0
        %684 = vdwg.mxu0
        %v686 = vsel %vm572, %v603, 0
        %688 = vmatprep.subr.mxu0 0.0
        %689 = vmatpush1.msra.mxu0 %v547
        %690 = vmatprep.subr.mxu0 0.0
        %691 = vmatpush1.msra.mxu0 %v548
        %692 = vmatprep.subr.mxu0 0.0
        %693 = vmatpush1.msra.mxu0 %v549
        %694 = vmatprep.subr.mxu0 0.0
        %695 = vmatpush1.msra.mxu0 %v550
        %696 = vmatprep.subr.mxu0 0.0
        %697 = vmatpush1.msra.mxu0 %v551
        %698 = vmatprep.subr.mxu0 0.0
        %699 = vmatpush1.msra.mxu0 %v552
        %700 = vmatprep.subr.mxu0 0.0
        %701 = vmatpush1.msra.mxu0 %v553
        %702 = vmatprep.subr.mxu0 0.0
        %703 = vmatpush1.msra.mxu0 0.0
        %704 = vmatprep.subr.mxu0 0.0
        %705 = vmatpush1.msra.mxu0 0.0
        %706 = vmatprep.subr.mxu0 0.0
        %707 = vmatpush1.msra.mxu0 0.0
        %708 = vmatprep.subr.mxu0 0.0
        %709 = vmatpush1.msra.mxu0 0.0
        %710 = vmatprep.subr.mxu0 0.0
        %711 = vmatpush1.msra.mxu0 0.0
        %712 = vmatprep.subr.mxu0 0.0
        %713 = vmatpush1.msra.mxu0 0.0
        %714 = vmatprep.subr.mxu0 0.0
        %715 = vmatpush1.msra.mxu0 0.0
        %716 = vmatprep.subr.mxu0 0.0
        %717 = vmatpush1.msra.mxu0 0.0
        %718 = vmatprep.subr.mxu0 0.0
        %719 = vmatpush1.msra.mxu0 0.0
        %720 = vmatprep.subr.mxu0 0.0
        %721 = vmatpush1.msra.mxu0 0.0
        %722 = vmatprep.subr.mxu0 0.0
        %723 = vmatpush1.msra.mxu0 0.0
        %724 = vmatprep.subr.mxu0 0.0
        %725 = vmatpush1.msra.mxu0 0.0
        %726 = vmatprep.subr.mxu0 0.0
        %727 = vmatpush1.msra.mxu0 0.0
        %728 = vmatprep.subr.mxu0 0.0
        %729 = vmatpush1.msra.mxu0 0.0
        %730 = vmatprep.subr.mxu0 0.0
        %731 = vmatpush1.msra.mxu0 0.0
        %732 = vmatprep.subr.mxu0 0.0
        %733 = vmatpush1.msra.mxu0 0.0
        %734 = vmatprep.subr.mxu0 0.0
        %735 = vmatpush1.msra.mxu0 0.0
        %736 = vmatprep.subr.mxu0 0.0
        %737 = vmatpush1.msra.mxu0 0.0
        %738 = vmatprep.subr.mxu0 0.0
        %739 = vmatpush1.msra.mxu0 0.0
        %740 = vmatprep.subr.mxu0 0.0
        %741 = vmatpush1.msra.mxu0 0.0
        %742 = vmatprep.subr.mxu0 0.0
        %743 = vmatpush1.msra.mxu0 0.0
        %744 = vmatprep.subr.mxu0 0.0
        %745 = vmatpush1.msra.mxu0 0.0
        %746 = vmatprep.subr.mxu0 0.0
        %747 = vmatpush1.msra.mxu0 0.0
        %748 = vmatprep.subr.mxu0 0.0
        %749 = vmatpush1.msra.mxu0 0.0
        %750 = vmatprep.subr.mxu0 0.0
        %751 = vmatpush1.msra.mxu0 0.0
        %752 = vmatprep.mubr.f32.mxu0 0.0
        %753 = vmatmul.mubr.f32.gmra.mrb[0].mxu0 %v686
        %v754 = vpop.f32.mrb[0].mxu0
        %v755 = vadd.f32 %v682, %v754
        %v756 = vpop.f32.mrb[0].mxu0
        %757 = vdwg.mxu0
        %v758 = vlaneseq
        %v759 = vshrl.u32 %v758, 7
        %v760 = vsub.s32 0, %v759
        %v761 = vrot.slane %v544, %v760
        %v762 = vadd.f32 %v755, %v761
        %v763 = vmax.f32 %v762, 0.0
        %v764 = vlaneseq
        %v765 = vshrl.u32 %v764, 7
        %v766 = vld [vmem:[%s465] sm:$0xff]
        %v767 = vld [vmem:[%s474] sm:$0xff]
        %v768 = vsel %vm572, %v766, 0.0
        %769 = vadd.xlane.f32.xlu0 %v768
        %v770 = vpop.xlane.xlu0 %769
        %771 = vadd.xlane.f32.xlu0 %v767
        %v772 = vpop.xlane.xlu0 %771
        %v773 = vadd.f32 %v770, %v772
        %v774 = vmul.f32 %v773, 0.0054347827
        %v775 = vsub.f32 %v766, %v774
        %v776 = vsub.f32 %v767, %v774
        %v777 = vmul.f32 %v775, %v775
        %v778 = vsel %vm572, %v777, 0.0
        %779 = vadd.xlane.f32.xlu0 %v778
        %v780 = vpop.xlane.xlu0 %779
        %v781 = vmul.f32 %v776, %v776
        %782 = vadd.xlane.f32.xlu0 %v781
        %v783 = vpop.xlane.xlu0 %782
        %v784 = vadd.f32 %v780, %v783
        %v785 = vmul.f32 %v784, 0.0054347827
        %v786 = vadd.f32 %v785, 1e-05
        %v787 = vrsqrt.pop %v786
        %v788 = vmul.f32 %v775, %v787
        %v789 = vmul.f32 %v788, %v597
        %v790 = vadd.f32 %v789, %v602
        %v791 = vmul.f32 %v776, %v787
        %v792 = vmul.f32 %v791, %v608
        %v793 = vadd.f32 %v792, %v613
        %794 = vmatprep.subr.mxu0 0.0
        %795 = vmatpush1.msra.mxu0 %v554
        %796 = vmatprep.subr.mxu0 0.0
        %797 = vmatpush1.msra.mxu0 %v555
        %798 = vmatprep.subr.mxu0 0.0
        %799 = vmatpush1.msra.mxu0 %v556
        %800 = vmatprep.subr.mxu0 0.0
        %801 = vmatpush1.msra.mxu0 %v557
        %802 = vmatprep.subr.mxu0 0.0
        %803 = vmatpush1.msra.mxu0 %v558
        %804 = vmatprep.subr.mxu0 0.0
        %805 = vmatpush1.msra.mxu0 %v559
        %806 = vmatprep.subr.mxu0 0.0
        %807 = vmatpush1.msra.mxu0 %v560
        %808 = vmatprep.subr.mxu0 0.0
        %809 = vmatpush1.msra.mxu0 %v561
        %810 = vmatprep.subr.mxu0 0.0
        %811 = vmatpush1.msra.mxu0 %v562
        %812 = vmatprep.subr.mxu0 0.0
        %813 = vmatpush1.msra.mxu0 %v563
        %814 = vmatprep.subr.mxu0 0.0
        %815 = vmatpush1.msra.mxu0 %v564
        %816 = vmatprep.subr.mxu0 0.0
        %817 = vmatpush1.msra.mxu0 %v565
        %818 = vmatprep.subr.mxu0 0.0
        %819 = vmatpush1.msra.mxu0 %v566
        %820 = vmatprep.subr.mxu0 0.0
        %821 = vmatpush1.msra.mxu0 %v567
        %822 = vmatprep.subr.mxu0 0.0
        %823 = vmatpush1.msra.mxu0 %v568
        %824 = vmatprep.subr.mxu0 0.0
        %825 = vmatpush1.msra.mxu0 %v569
        %826 = vmatprep.subr.mxu0 0.0
        %827 = vmatpush1.msra.mxu0 0.0
        %828 = vmatprep.subr.mxu0 0.0
        %829 = vmatpush1.msra.mxu0 0.0
        %830 = vmatprep.subr.mxu0 0.0
        %831 = vmatpush1.msra.mxu0 0.0
        %832 = vmatprep.subr.mxu0 0.0
        %833 = vmatpush1.msra.mxu0 0.0
        %834 = vmatprep.subr.mxu0 0.0
        %835 = vmatpush1.msra.mxu0 0.0
        %836 = vmatprep.subr.mxu0 0.0
        %837 = vmatpush1.msra.mxu0 0.0
        %838 = vmatprep.subr.mxu0 0.0
        %839 = vmatpush1.msra.mxu0 0.0
        %840 = vmatprep.subr.mxu0 0.0
        %841 = vmatpush1.msra.mxu0 0.0
        %842 = vmatprep.subr.mxu0 0.0
        %843 = vmatpush1.msra.mxu0 0.0
        %844 = vmatprep.subr.mxu0 0.0
        %845 = vmatpush1.msra.mxu0 0.0
        %846 = vmatprep.subr.mxu0 0.0
        %847 = vmatpush1.msra.mxu0 0.0
        %848 = vmatprep.subr.mxu0 0.0
        %849 = vmatpush1.msra.mxu0 0.0
        %850 = vmatprep.subr.mxu0 0.0
        %851 = vmatpush1.msra.mxu0 0.0
        %852 = vmatprep.subr.mxu0 0.0
        %853 = vmatpush1.msra.mxu0 0.0
        %854 = vmatprep.subr.mxu0 0.0
        %855 = vmatpush1.msra.mxu0 0.0
        %856 = vmatprep.subr.mxu0 0.0
        %857 = vmatpush1.msra.mxu0 0.0
        %858 = vmatprep.mubr.f32.mxu0 0.0
        %859 = vmatmul.mubr.f32.gmra.mrb[0].mxu0 %v793
        %v860 = vpop.f32.mrb[0].mxu0
        %v861 = vadd.f32 0.0, %v860
        %v862 = vpop.f32.mrb[0].mxu0
        %863 = vdwg.mxu0
        %v865 = vsel %vm572, %v790, 0
        %867 = vmatprep.subr.mxu0 0.0
        %868 = vmatpush1.msra.mxu0 %v547
        %869 = vmatprep.subr.mxu0 0.0
        %870 = vmatpush1.msra.mxu0 %v548
        %871 = vmatprep.subr.mxu0 0.0
        %872 = vmatpush1.msra.mxu0 %v549
        %873 = vmatprep.subr.mxu0 0.0
        %874 = vmatpush1.msra.mxu0 %v550
        %875 = vmatprep.subr.mxu0 0.0
        %876 = vmatpush1.msra.mxu0 %v551
        %877 = vmatprep.subr.mxu0 0.0
        %878 = vmatpush1.msra.mxu0 %v552
        %879 = vmatprep.subr.mxu0 0.0
        %880 = vmatpush1.msra.mxu0 %v553
        %881 = vmatprep.subr.mxu0 0.0
        %882 = vmatpush1.msra.mxu0 0.0
        %883 = vmatprep.subr.mxu0 0.0
        %884 = vmatpush1.msra.mxu0 0.0
        %885 = vmatprep.subr.mxu0 0.0
        %886 = vmatpush1.msra.mxu0 0.0
        %887 = vmatprep.subr.mxu0 0.0
        %888 = vmatpush1.msra.mxu0 0.0
        %889 = vmatprep.subr.mxu0 0.0
        %890 = vmatpush1.msra.mxu0 0.0
        %891 = vmatprep.subr.mxu0 0.0
        %892 = vmatpush1.msra.mxu0 0.0
        %893 = vmatprep.subr.mxu0 0.0
        %894 = vmatpush1.msra.mxu0 0.0
        %895 = vmatprep.subr.mxu0 0.0
        %896 = vmatpush1.msra.mxu0 0.0
        %897 = vmatprep.subr.mxu0 0.0
        %898 = vmatpush1.msra.mxu0 0.0
        %899 = vmatprep.subr.mxu0 0.0
        %900 = vmatpush1.msra.mxu0 0.0
        %901 = vmatprep.subr.mxu0 0.0
        %902 = vmatpush1.msra.mxu0 0.0
        %903 = vmatprep.subr.mxu0 0.0
        %904 = vmatpush1.msra.mxu0 0.0
        %905 = vmatprep.subr.mxu0 0.0
        %906 = vmatpush1.msra.mxu0 0.0
        %907 = vmatprep.subr.mxu0 0.0
        %908 = vmatpush1.msra.mxu0 0.0
        %909 = vmatprep.subr.mxu0 0.0
        %910 = vmatpush1.msra.mxu0 0.0
        %911 = vmatprep.subr.mxu0 0.0
        %912 = vmatpush1.msra.mxu0 0.0
        %913 = vmatprep.subr.mxu0 0.0
        %914 = vmatpush1.msra.mxu0 0.0
        %915 = vmatprep.subr.mxu0 0.0
        %916 = vmatpush1.msra.mxu0 0.0
        %917 = vmatprep.subr.mxu0 0.0
        %918 = vmatpush1.msra.mxu0 0.0
        %919 = vmatprep.subr.mxu0 0.0
        %920 = vmatpush1.msra.mxu0 0.0
        %921 = vmatprep.subr.mxu0 0.0
        %922 = vmatpush1.msra.mxu0 0.0
        %923 = vmatprep.subr.mxu0 0.0
        %924 = vmatpush1.msra.mxu0 0.0
        %925 = vmatprep.subr.mxu0 0.0
        %926 = vmatpush1.msra.mxu0 0.0
        %927 = vmatprep.subr.mxu0 0.0
        %928 = vmatpush1.msra.mxu0 0.0
        %929 = vmatprep.subr.mxu0 0.0
        %930 = vmatpush1.msra.mxu0 0.0
        %931 = vmatprep.mubr.f32.mxu0 0.0
        %932 = vmatmul.mubr.f32.gmra.mrb[0].mxu0 %v865
        %v933 = vpop.f32.mrb[0].mxu0
        %v934 = vadd.f32 %v861, %v933
        %v935 = vpop.f32.mrb[0].mxu0
        %936 = vdwg.mxu0
        %v937 = vadd.f32 %v934, %v761
        %v938 = vmax.f32 %v937, 0.0
        %p939 = scmp.gt.s32.totalorder %s39, 0
        %s940 = scalar_select %p939, 1, 0
        %v941 = vstv %s940
        %vm942 = vcmp.eq.s32.totalorder %v941, 1
        %v943 = vsel %vm942, %v938, 0.0
        %p944 = scmp.lt.s32.totalorder %s39, 0
        %s945 = scalar_select %p944, 1, 0
        %v946 = vstv %s945
        %vm947 = vcmp.eq.s32.totalorder %v946, 1
        %v948 = vsel %vm947, %v938, 0.0
        %v949 = vrot.slane %v763, 7
        %vm950 = vcmp.eq.s32.totalorder %v765, 0
        %v951 = vlaneseq
        %v952 = vshrl.u32 %v951, 7
        %v953 = vsub.s32 0, %v952
        %v954 = vrot.slane %v943, %v953
        %v955 = vsel %vm950, %v954, %v949
        %v956 = vrot.slane %v763, 1
        %vm957 = vcmp.eq.s32.totalorder %v765, 7
        %v958 = vlaneseq
        %v959 = vshrl.u32 %v958, 7
        %v960 = vsub.s32 1, %v959
        %v961 = vrot.slane %v948, %v960
        %v962 = vsel %vm957, %v961, %v956
        %v963 = vld [vmem:[#allocation13] sm:$0xff]
        %v964 = vld [vmem:[#allocation13 + $0x8] sm:$0xff]
        %v965 = vld [vmem:[#allocation13 + $0x10] sm:$0xff]
        %v966 = vld [vmem:[#allocation13 + $0x18] sm:$0xff]
        %v967 = vld [vmem:[#allocation13 + $0x20] sm:$0xff]
        %v968 = vld [vmem:[#allocation13 + $0x28] sm:$0xff]
        %v969 = vld [vmem:[#allocation13 + $0x30] sm:$0xff]
        %v970 = vld [vmem:[#allocation13 + $0x38] sm:$0xff]
        %v971 = vld [vmem:[#allocation13 + $0x40] sm:$0xff]
        %v972 = vld [vmem:[#allocation13 + $0x48] sm:$0xff]
        %v973 = vld [vmem:[#allocation13 + $0x50] sm:$0xff]
        %v974 = vld [vmem:[#allocation13 + $0x58] sm:$0xff]
        %v975 = vld [vmem:[#allocation13 + $0x60] sm:$0xff]
        %v976 = vld [vmem:[#allocation13 + $0x68] sm:$0xff]
        %v977 = vld [vmem:[#allocation13 + $0x70] sm:$0xff]
        %v978 = vld [vmem:[#allocation13 + $0x78] sm:$0xff]
        %s979 = scalar_lea.vmem [#allocation13], 128
        %v980 = vld [vmem:[%s979] sm:$0xff]
        %v981 = vld [vmem:[%s979 + $0x8] sm:$0xff]
        %v982 = vld [vmem:[%s979 + $0x10] sm:$0xff]
        %v983 = vld [vmem:[%s979 + $0x18] sm:$0xff]
        %v984 = vld [vmem:[%s979 + $0x20] sm:$0xff]
        %v985 = vld [vmem:[%s979 + $0x28] sm:$0xff]
        %v986 = vld [vmem:[%s979 + $0x30] sm:$0xff]
        %v987 = vld [vmem:[%s979 + $0x38] sm:$0xff]
        %v988 = vld [vmem:[%s979 + $0x40] sm:$0xff]
        %v989 = vld [vmem:[%s979 + $0x48] sm:$0xff]
        %v990 = vld [vmem:[%s979 + $0x50] sm:$0xff]
        %v991 = vld [vmem:[%s979 + $0x58] sm:$0xff]
        %v992 = vld [vmem:[%s979 + $0x60] sm:$0xff]
        %v993 = vld [vmem:[%s979 + $0x68] sm:$0xff]
        %v994 = vld [vmem:[%s979 + $0x70] sm:$0xff]
        %v995 = vld [vmem:[%s979 + $0x78] sm:$0xff]
        %996 = vmatprep.subr.mxu0 0.0
        %997 = vmatpush1.msra.mxu0 %v980
        %998 = vmatprep.subr.mxu0 0.0
        %999 = vmatpush1.msra.mxu0 %v981
        %1000 = vmatprep.subr.mxu0 0.0
        %1001 = vmatpush1.msra.mxu0 %v982
        %1002 = vmatprep.subr.mxu0 0.0
        %1003 = vmatpush1.msra.mxu0 %v983
        %1004 = vmatprep.subr.mxu0 0.0
        %1005 = vmatpush1.msra.mxu0 %v984
        %1006 = vmatprep.subr.mxu0 0.0
        %1007 = vmatpush1.msra.mxu0 %v985
        %1008 = vmatprep.subr.mxu0 0.0
        %1009 = vmatpush1.msra.mxu0 %v986
        %1010 = vmatprep.subr.mxu0 0.0
        %1011 = vmatpush1.msra.mxu0 %v987
        %1012 = vmatprep.subr.mxu0 0.0
        %1013 = vmatpush1.msra.mxu0 %v988
        %1014 = vmatprep.subr.mxu0 0.0
        %1015 = vmatpush1.msra.mxu0 %v989
        %1016 = vmatprep.subr.mxu0 0.0
        %1017 = vmatpush1.msra.mxu0 %v990
        %1018 = vmatprep.subr.mxu0 0.0
        %1019 = vmatpush1.msra.mxu0 %v991
        %1020 = vmatprep.subr.mxu0 0.0
        %1021 = vmatpush1.msra.mxu0 %v992
        %1022 = vmatprep.subr.mxu0 0.0
        %1023 = vmatpush1.msra.mxu0 %v993
        %1024 = vmatprep.subr.mxu0 0.0
        %1025 = vmatpush1.msra.mxu0 %v994
        %1026 = vmatprep.subr.mxu0 0.0
        %1027 = vmatpush1.msra.mxu0 %v995
        %1028 = vmatprep.subr.mxu0 0.0
        %1029 = vmatpush1.msra.mxu0 0.0
        %1030 = vmatprep.subr.mxu0 0.0
        %1031 = vmatpush1.msra.mxu0 0.0
        %1032 = vmatprep.subr.mxu0 0.0
        %1033 = vmatpush1.msra.mxu0 0.0
        %1034 = vmatprep.subr.mxu0 0.0
        %1035 = vmatpush1.msra.mxu0 0.0
        %1036 = vmatprep.subr.mxu0 0.0
        %1037 = vmatpush1.msra.mxu0 0.0
        %1038 = vmatprep.subr.mxu0 0.0
        %1039 = vmatpush1.msra.mxu0 0.0
        %1040 = vmatprep.subr.mxu0 0.0
        %1041 = vmatpush1.msra.mxu0 0.0
        %1042 = vmatprep.subr.mxu0 0.0
        %1043 = vmatpush1.msra.mxu0 0.0
        %1044 = vmatprep.subr.mxu0 0.0
        %1045 = vmatpush1.msra.mxu0 0.0
        %1046 = vmatprep.subr.mxu0 0.0
        %1047 = vmatpush1.msra.mxu0 0.0
        %1048 = vmatprep.subr.mxu0 0.0
        %1049 = vmatpush1.msra.mxu0 0.0
        %1050 = vmatprep.subr.mxu0 0.0
        %1051 = vmatpush1.msra.mxu0 0.0
        %1052 = vmatprep.subr.mxu0 0.0
        %1053 = vmatpush1.msra.mxu0 0.0
        %1054 = vmatprep.subr.mxu0 0.0
        %1055 = vmatpush1.msra.mxu0 0.0
        %1056 = vmatprep.subr.mxu0 0.0
        %1057 = vmatpush1.msra.mxu0 0.0
        %1058 = vmatprep.subr.mxu0 0.0
        %1059 = vmatpush1.msra.mxu0 0.0
        %1060 = vmatprep.mubr.f32.mxu0 0.0
        %1061 = vmatmul.mubr.f32.gmra.mrb[0].mxu0 %v763
        %v1062 = vpop.f32.mrb[0].mxu0
        %v1063 = vadd.f32 0.0, %v1062
        %v1064 = vpop.f32.mrb[0].mxu0
        %1065 = vdwg.mxu0
        %1066 = vmatprep.subr.mxu0 0.0
        %1067 = vmatpush1.msra.mxu0 %v963
        %1068 = vmatprep.subr.mxu0 0.0
        %1069 = vmatpush1.msra.mxu0 %v964
        %1070 = vmatprep.subr.mxu0 0.0
        %1071 = vmatpush1.msra.mxu0 %v965
        %1072 = vmatprep.subr.mxu0 0.0
        %1073 = vmatpush1.msra.mxu0 %v966
        %1074 = vmatprep.subr.mxu0 0.0
        %1075 = vmatpush1.msra.mxu0 %v967
        %1076 = vmatprep.subr.mxu0 0.0
        %1077 = vmatpush1.msra.mxu0 %v968
        %1078 = vmatprep.subr.mxu0 0.0
        %1079 = vmatpush1.msra.mxu0 %v969
        %1080 = vmatprep.subr.mxu0 0.0
        %1081 = vmatpush1.msra.mxu0 %v970
        %1082 = vmatprep.subr.mxu0 0.0
        %1083 = vmatpush1.msra.mxu0 %v971
        %1084 = vmatprep.subr.mxu0 0.0
        %1085 = vmatpush1.msra.mxu0 %v972
        %1086 = vmatprep.subr.mxu0 0.0
        %1087 = vmatpush1.msra.mxu0 %v973
        %1088 = vmatprep.subr.mxu0 0.0
        %1089 = vmatpush1.msra.mxu0 %v974
        %1090 = vmatprep.subr.mxu0 0.0
        %1091 = vmatpush1.msra.mxu0 %v975
        %1092 = vmatprep.subr.mxu0 0.0
        %1093 = vmatpush1.msra.mxu0 %v976
        %1094 = vmatprep.subr.mxu0 0.0
        %1095 = vmatpush1.msra.mxu0 %v977
        %1096 = vmatprep.subr.mxu0 0.0
        %1097 = vmatpush1.msra.mxu0 %v978
        %1098 = vmatprep.subr.mxu0 0.0
        %1099 = vmatpush1.msra.mxu0 0.0
        %1100 = vmatprep.subr.mxu0 0.0
        %1101 = vmatpush1.msra.mxu0 0.0
        %1102 = vmatprep.subr.mxu0 0.0
        %1103 = vmatpush1.msra.mxu0 0.0
        %1104 = vmatprep.subr.mxu0 0.0
        %1105 = vmatpush1.msra.mxu0 0.0
        %1106 = vmatprep.subr.mxu0 0.0
        %1107 = vmatpush1.msra.mxu0 0.0
        %1108 = vmatprep.subr.mxu0 0.0
        %1109 = vmatpush1.msra.mxu0 0.0
        %1110 = vmatprep.subr.mxu0 0.0
        %1111 = vmatpush1.msra.mxu0 0.0
        %1112 = vmatprep.subr.mxu0 0.0
        %1113 = vmatpush1.msra.mxu0 0.0
        %1114 = vmatprep.subr.mxu0 0.0
        %1115 = vmatpush1.msra.mxu0 0.0
        %1116 = vmatprep.subr.mxu0 0.0
        %1117 = vmatpush1.msra.mxu0 0.0
        %1118 = vmatprep.subr.mxu0 0.0
        %1119 = vmatpush1.msra.mxu0 0.0
        %1120 = vmatprep.subr.mxu0 0.0
        %1121 = vmatpush1.msra.mxu0 0.0
        %1122 = vmatprep.subr.mxu0 0.0
        %1123 = vmatpush1.msra.mxu0 0.0
        %1124 = vmatprep.subr.mxu0 0.0
        %1125 = vmatpush1.msra.mxu0 0.0
        %1126 = vmatprep.subr.mxu0 0.0
        %1127 = vmatpush1.msra.mxu0 0.0
        %1128 = vmatprep.subr.mxu0 0.0
        %1129 = vmatpush1.msra.mxu0 0.0
        %1130 = vmatprep.mubr.f32.mxu0 0.0
        %1131 = vmatmul.mubr.f32.gmra.mrb[0].mxu0 %v955
        %v1132 = vpop.f32.mrb[0].mxu0
        %v1133 = vadd.f32 %v1063, %v1132
        %v1134 = vpop.f32.mrb[0].mxu0
        %1135 = vdwg.mxu0
        %s1136 = scalar_lea.vmem [#allocation13], 256
        %v1137 = vld [vmem:[%s1136] sm:$0xff]
        %v1138 = vld [vmem:[%s1136 + $0x8] sm:$0xff]
        %v1139 = vld [vmem:[%s1136 + $0x10] sm:$0xff]
        %v1140 = vld [vmem:[%s1136 + $0x18] sm:$0xff]
        %v1141 = vld [vmem:[%s1136 + $0x20] sm:$0xff]
        %v1142 = vld [vmem:[%s1136 + $0x28] sm:$0xff]
        %v1143 = vld [vmem:[%s1136 + $0x30] sm:$0xff]
        %v1144 = vld [vmem:[%s1136 + $0x38] sm:$0xff]
        %v1145 = vld [vmem:[%s1136 + $0x40] sm:$0xff]
        %v1146 = vld [vmem:[%s1136 + $0x48] sm:$0xff]
        %v1147 = vld [vmem:[%s1136 + $0x50] sm:$0xff]
        %v1148 = vld [vmem:[%s1136 + $0x58] sm:$0xff]
        %v1149 = vld [vmem:[%s1136 + $0x60] sm:$0xff]
        %v1150 = vld [vmem:[%s1136 + $0x68] sm:$0xff]
        %v1151 = vld [vmem:[%s1136 + $0x70] sm:$0xff]
        %v1152 = vld [vmem:[%s1136 + $0x78] sm:$0xff]
        %1153 = vmatprep.subr.mxu0 0.0
        %1154 = vmatpush1.msra.mxu0 %v1137
        %1155 = vmatprep.subr.mxu0 0.0
        %1156 = vmatpush1.msra.mxu0 %v1138
        %1157 = vmatprep.subr.mxu0 0.0
        %1158 = vmatpush1.msra.mxu0 %v1139
        %1159 = vmatprep.subr.mxu0 0.0
        %1160 = vmatpush1.msra.mxu0 %v1140
        %1161 = vmatprep.subr.mxu0 0.0
        %1162 = vmatpush1.msra.mxu0 %v1141
        %1163 = vmatprep.subr.mxu0 0.0
        %1164 = vmatpush1.msra.mxu0 %v1142
        %1165 = vmatprep.subr.mxu0 0.0
        %1166 = vmatpush1.msra.mxu0 %v1143
        %1167 = vmatprep.subr.mxu0 0.0
        %1168 = vmatpush1.msra.mxu0 %v1144
        %1169 = vmatprep.subr.mxu0 0.0
        %1170 = vmatpush1.msra.mxu0 %v1145
        %1171 = vmatprep.subr.mxu0 0.0
        %1172 = vmatpush1.msra.mxu0 %v1146
        %1173 = vmatprep.subr.mxu0 0.0
        %1174 = vmatpush1.msra.mxu0 %v1147
        %1175 = vmatprep.subr.mxu0 0.0
        %1176 = vmatpush1.msra.mxu0 %v1148
        %1177 = vmatprep.subr.mxu0 0.0
        %1178 = vmatpush1.msra.mxu0 %v1149
        %1179 = vmatprep.subr.mxu0 0.0
        %1180 = vmatpush1.msra.mxu0 %v1150
        %1181 = vmatprep.subr.mxu0 0.0
        %1182 = vmatpush1.msra.mxu0 %v1151
        %1183 = vmatprep.subr.mxu0 0.0
        %1184 = vmatpush1.msra.mxu0 %v1152
        %1185 = vmatprep.subr.mxu0 0.0
        %1186 = vmatpush1.msra.mxu0 0.0
        %1187 = vmatprep.subr.mxu0 0.0
        %1188 = vmatpush1.msra.mxu0 0.0
        %1189 = vmatprep.subr.mxu0 0.0
        %1190 = vmatpush1.msra.mxu0 0.0
        %1191 = vmatprep.subr.mxu0 0.0
        %1192 = vmatpush1.msra.mxu0 0.0
        %1193 = vmatprep.subr.mxu0 0.0
        %1194 = vmatpush1.msra.mxu0 0.0
        %1195 = vmatprep.subr.mxu0 0.0
        %1196 = vmatpush1.msra.mxu0 0.0
        %1197 = vmatprep.subr.mxu0 0.0
        %1198 = vmatpush1.msra.mxu0 0.0
        %1199 = vmatprep.subr.mxu0 0.0
        %1200 = vmatpush1.msra.mxu0 0.0
        %1201 = vmatprep.subr.mxu0 0.0
        %1202 = vmatpush1.msra.mxu0 0.0
        %1203 = vmatprep.subr.mxu0 0.0
        %1204 = vmatpush1.msra.mxu0 0.0
        %1205 = vmatprep.subr.mxu0 0.0
        %1206 = vmatpush1.msra.mxu0 0.0
        %1207 = vmatprep.subr.mxu0 0.0
        %1208 = vmatpush1.msra.mxu0 0.0
        %1209 = vmatprep.subr.mxu0 0.0
        %1210 = vmatpush1.msra.mxu0 0.0
        %1211 = vmatprep.subr.mxu0 0.0
        %1212 = vmatpush1.msra.mxu0 0.0
        %1213 = vmatprep.subr.mxu0 0.0
        %1214 = vmatpush1.msra.mxu0 0.0
        %1215 = vmatprep.subr.mxu0 0.0
        %1216 = vmatpush1.msra.mxu0 0.0
        %1217 = vmatprep.mubr.f32.mxu0 0.0
        %1218 = vmatmul.mubr.f32.gmra.mrb[0].mxu0 %v962
        %v1219 = vpop.f32.mrb[0].mxu0
        %v1220 = vadd.f32 0.0, %v1219
        %v1221 = vpop.f32.mrb[0].mxu0
        %1222 = vdwg.mxu0
        %v1223 = vadd.f32 %v1133, %v1220
        %v1224 = vlaneseq
        %v1225 = vshrl.u32 %v1224, 7
        %v1226 = vsub.s32 0, %v1225
        %v1227 = vrot.slane %v545, %v1226
        %v1228 = vadd.f32 %v1223, %v1227
        %v1229 = vmax.f32 %v1228, 0.0
        %v1230 = vld [vmem:[#allocation14] sm:$0xff]
        %v1231 = vld [vmem:[#allocation14 + $0x8] sm:$0xff]
        %v1232 = vld [vmem:[#allocation14 + $0x10] sm:$0xff]
        %v1233 = vld [vmem:[#allocation14 + $0x18] sm:$0xff]
        %v1234 = vld [vmem:[#allocation14 + $0x20] sm:$0xff]
        %v1235 = vld [vmem:[#allocation14 + $0x28] sm:$0xff]
        %v1236 = vld [vmem:[#allocation14 + $0x30] sm:$0xff]
        %v1237 = vld [vmem:[#allocation14 + $0x38] sm:$0xff]
        %v1238 = vld [vmem:[#allocation14 + $0x40] sm:$0xff]
        %v1239 = vld [vmem:[#allocation14 + $0x48] sm:$0xff]
        %v1240 = vld [vmem:[#allocation14 + $0x50] sm:$0xff]
        %v1241 = vld [vmem:[#allocation14 + $0x58] sm:$0xff]
        %v1242 = vld [vmem:[#allocation14 + $0x60] sm:$0xff]
        %v1243 = vld [vmem:[#allocation14 + $0x68] sm:$0xff]
        %v1244 = vld [vmem:[#allocation14 + $0x70] sm:$0xff]
        %v1245 = vld [vmem:[#allocation14 + $0x78] sm:$0xff]
        %v1246 = vlaneseq
        %v1247 = vshrl.u32 %v1246, 7
        %v1248 = vsub.s32 0, %v1247
        %v1249 = vrot.slane %v546, %v1248
        %1250 = vmatprep.subr.mxu0 0.0
        %1251 = vmatpush1.msra.mxu0 %v1230
        %1252 = vmatprep.subr.mxu0 0.0
        %1253 = vmatpush1.msra.mxu0 %v1231
        %1254 = vmatprep.subr.mxu0 0.0
        %1255 = vmatpush1.msra.mxu0 %v1232
        %1256 = vmatprep.subr.mxu0 0.0
        %1257 = vmatpush1.msra.mxu0 %v1233
        %1258 = vmatprep.subr.mxu0 0.0
        %1259 = vmatpush1.msra.mxu0 %v1234
        %1260 = vmatprep.subr.mxu0 0.0
        %1261 = vmatpush1.msra.mxu0 %v1235
        %1262 = vmatprep.subr.mxu0 0.0
        %1263 = vmatpush1.msra.mxu0 %v1236
        %1264 = vmatprep.subr.mxu0 0.0
        %1265 = vmatpush1.msra.mxu0 %v1237
        %1266 = vmatprep.subr.mxu0 0.0
        %1267 = vmatpush1.msra.mxu0 %v1238
        %1268 = vmatprep.subr.mxu0 0.0
        %1269 = vmatpush1.msra.mxu0 %v1239
        %1270 = vmatprep.subr.mxu0 0.0
        %1271 = vmatpush1.msra.mxu0 %v1240
        %1272 = vmatprep.subr.mxu0 0.0
        %1273 = vmatpush1.msra.mxu0 %v1241
        %1274 = vmatprep.subr.mxu0 0.0
        %1275 = vmatpush1.msra.mxu0 %v1242
        %1276 = vmatprep.subr.mxu0 0.0
        %1277 = vmatpush1.msra.mxu0 %v1243
        %1278 = vmatprep.subr.mxu0 0.0
        %1279 = vmatpush1.msra.mxu0 %v1244
        %1280 = vmatprep.subr.mxu0 0.0
        %1281 = vmatpush1.msra.mxu0 %v1245
        %1282 = vmatprep.subr.mxu0 0.0
        %1283 = vmatpush1.msra.mxu0 0.0
        %1284 = vmatprep.subr.mxu0 0.0
        %1285 = vmatpush1.msra.mxu0 0.0
        %1286 = vmatprep.subr.mxu0 0.0
        %1287 = vmatpush1.msra.mxu0 0.0
        %1288 = vmatprep.subr.mxu0 0.0
        %1289 = vmatpush1.msra.mxu0 0.0
        %1290 = vmatprep.subr.mxu0 0.0
        %1291 = vmatpush1.msra.mxu0 0.0
        %1292 = vmatprep.subr.mxu0 0.0
        %1293 = vmatpush1.msra.mxu0 0.0
        %1294 = vmatprep.subr.mxu0 0.0
        %1295 = vmatpush1.msra.mxu0 0.0
        %1296 = vmatprep.subr.mxu0 0.0
        %1297 = vmatpush1.msra.mxu0 0.0
        %1298 = vmatprep.subr.mxu0 0.0
        %1299 = vmatpush1.msra.mxu0 0.0
        %1300 = vmatprep.subr.mxu0 0.0
        %1301 = vmatpush1.msra.mxu0 0.0
        %1302 = vmatprep.subr.mxu0 0.0
        %1303 = vmatpush1.msra.mxu0 0.0
        %1304 = vmatprep.subr.mxu0 0.0
        %1305 = vmatpush1.msra.mxu0 0.0
        %1306 = vmatprep.subr.mxu0 0.0
        %1307 = vmatpush1.msra.mxu0 0.0
        %1308 = vmatprep.subr.mxu0 0.0
        %1309 = vmatpush1.msra.mxu0 0.0
        %1310 = vmatprep.subr.mxu0 0.0
        %1311 = vmatpush1.msra.mxu0 0.0
        %1312 = vmatprep.subr.mxu0 0.0
        %1313 = vmatpush1.msra.mxu0 0.0
        %1314 = vmatprep.mubr.f32.mxu0 0.0
        %1315 = vmatmul.mubr.f32.gmra.mrb[0].mxu0 %v1229
        %v1316 = vpop.f32.mrb[0].mxu0
        %v1317 = vadd.f32 %v1249, %v1316
        %v1318 = vpop.f32.mrb[0].mxu0
        %1319 = vdwg.mxu0
        %v1320 = vadd.f32 %v1317, %v573
        %1321 = vst [vmem:[%s539] sm:$0xff] %v1320
        %s1322 = sand.u32 %s273, 1
        %s1323 = scalar_lea.sflag [#allocation4], %s1322
        %s1324 = sand.u32 %s273, 1
        %s1325 = smul.addr %s1324, 8
        %s1326 = scalar_lea.vmem [#allocation16], %s1325
        // Predicated region
        $region89: #{tpu_custom_call.1} parent=55 // pred_check
          %p1327 = pneg %p283
        $region90: #{tpu_custom_call.1} parent=55 // pred_check_branch
          %1329 = sbr.rel (%p1327) target = $region92
        $region91: #{tpu_custom_call.1} parent=55 // pred_region
          %s1331 = ssub.s32 128, 128
          %1332 = vsyncadd %s1323, %s1331
          %s1333 = sadd.s32 %s39, %s38
          %s1334 = smul.addr %s1333, 128
          %s1335 = scalar_lea.hbm %s9, %s1334
          %s1337 = sshll.u32 %s1326, 4
          %s1338 = int_to_ptr.vmem [resolvable:$true] %s1337
          %1340 = dma.vmem_to_hbm [thread:$0]  %s1338, 128, %s1335, %s1323
        $region92: #{tpu_custom_call.1} parent=55 // pred_fallthru
          _
      $region56: #{tpu_custom_call.1} parent=5 // pred_fallthru
        _
      %p1341 = scmp.le.s32.totalorder 2, %s29
      // Predicated region
      $region93: #{tpu_custom_call.1} parent=5 // pred_check
        %p1342 = pneg %p1341
      $region94: #{tpu_custom_call.1} parent=5 // pred_check_branch
        %1344 = sbr.rel (%p1342) target = $region96
      $region95: #{tpu_custom_call.1} parent=5 // pred_region
        %s1345 = ssub.s32 %s29, 2
        // Predicated region
        $region97: #{tpu_custom_call.1} parent=95 // pred_check
          %p1346 = pneg %p289
        $region98: #{tpu_custom_call.1} parent=95 // pred_check_branch
          %1348 = sbr.rel (%p1346) target = $region100
        $region99: #{tpu_custom_call.1} parent=95 // pred_region
          %s1349 = sand.u32 %s274, 1
          %s1350 = scalar_lea.sflag [#allocation4], %s1349
          %s1351 = sand.u32 %s274, 1
          %s1352 = smul.addr %s1351, 8
          %s1353 = scalar_lea.vmem [#allocation16], %s1352
          %1354 = dma.done %s1350, 128
        $region100: #{tpu_custom_call.1} parent=95 // pred_fallthru
          _
      $region96: #{tpu_custom_call.1} parent=5 // pred_fallthru
        _
    $region6: #{tpu_custom_call.1} parent=1 // loop_footer
      %s33 = sadd.s32 1, %s29
    $region7: #{tpu_custom_call.1} parent=1 // loop_footer_branch
      %28 = sbr.rel target = $region3
    $region8: #{tpu_custom_call.1} parent=1 // loop_exit
      _
    %1355 = vsyncpa [#allocation3], 1
    %s1356 = scalar_lea.sflag [#allocation3], 1
    %1357 = vsyncpa %s1356, 1
    %1358 = vsyncpa [#allocation6], 1
    %s1359 = scalar_lea.sflag [#allocation6], 1
    %1360 = vsyncpa %s1359, 1
    %1361 = vsyncpa [#allocation9], 1
    %s1362 = scalar_lea.sflag [#allocation9], 1
    %1363 = vsyncpa %s1362, 1
    %1364 = vsyncpa [#allocation12], 1
    %1365 = vsyncpa [#allocation15], 1
    %1366 = vsyncpa [#allocation4], 1
    %s1367 = scalar_lea.sflag [#allocation4], 1
    %1368 = vsyncpa %s1367, 1

</llo_original>
